<compile_context>
chip_gen: v7x
topology: tpu7x:2x2x1
jax: 0.10.0
libtpu: 0.0.40
codegen_flags: <defaults>
</compile_context>

<pallas_src>
import functools

import jax
import jax.numpy as jnp
from jax.experimental import pallas as pl
from jax.experimental.pallas import tpu as pltpu


# ------------------------------------------------ kernel 1: LN1 + QKV project ---
def qkv_project_kernel(x_ref, ln_g_ref, ln_b_ref, wq_ref, wk_ref, wv_ref,
                       q_ref, k_ref, v_ref, *, heads):
    """LayerNorm_1 + Q/K/V projections for one (batch, seq-tile) block.

    Runs exactly once per sequence position (hoisted out of the per-query-tile
    attention kernel).  Outputs are written head-split (H, rows, dh) bf16 so the
    attention kernel needs no relayout; 1/sqrt(dh) is already folded into wq.
    """
    f32 = jnp.float32
    cdt = wq_ref.dtype
    x = x_ref[0].astype(f32)                       # (TS, D)
    D = x.shape[-1]
    dh = D // heads

    mu = jnp.mean(x, axis=-1, keepdims=True)
    var = jnp.mean((x - mu) ** 2, axis=-1, keepdims=True)
    xn = ((x - mu) * jax.lax.rsqrt(var + 1e-6)
          * ln_g_ref[...] + ln_b_ref[...]).astype(cdt)

    qf = jnp.dot(xn, wq_ref[...], preferred_element_type=f32)   # scale pre-folded
    kf = jnp.dot(xn, wk_ref[...], preferred_element_type=f32)
    vf = jnp.dot(xn, wv_ref[...], preferred_element_type=f32)

    # Head-split store happens once per sequence position (amortized over every
    # query tile that re-reads it) -> the lane-slice relayout leaves the hot loop.
    for h in range(heads):
        sl = slice(h * dh, (h + 1) * dh)
        q_ref[0, h] = qf[:, sl].astype(q_ref.dtype)
        k_ref[0, h] = kf[:, sl].astype(k_ref.dtype)
        v_ref[0, h] = vf[:, sl].astype(v_ref.dtype)


# ----------------------------------------------- kernel 2: attention + FFN ------
def attn_ffn_kernel(pad_ref, xq_ref, q3_ref, k3_ref, v3_ref, wo_ref,
                    ln2_g_ref, ln2_b_ref, w1_ref, b1_ref, w2_ref, b2_ref,
                    out_ref, attn_ref, *, heads, future, ff_chunk, fast_exp):
    f32 = jnp.float32
    cdt = wo_ref.dtype

    q3 = q3_ref[0]                                 # (H, TQ, dh) bf16, pre-scaled
    k3 = k3_ref[0]                                 # (H, T,  dh) bf16
    v3 = v3_ref[0]                                 # (H, T,  dh) bf16
    x_q = xq_ref[0].astype(f32)                    # (TQ, D) residual input
    _, TQ, dh = q3.shape
    T = k3.shape[1]
    D = x_q.shape[-1]
    eps = 1e-6
    q0 = pl.program_id(1) * TQ                     # global row offset of this tile

    # ---- decoder mask (pad OR causal) built in-kernel: no (T,T) mask DMA ----
    pad = pad_ref[0] > 0.0                         # (1, T), True = padded key
    if future:
        masked = jnp.broadcast_to(pad, (TQ, T))
    else:
        row = q0 + jax.lax.broadcasted_iota(jnp.int32, (TQ, T), 0)
        col = jax.lax.broadcasted_iota(jnp.int32, (TQ, T), 1)
        masked = jnp.logical_or(col > row, pad)

    # ---- attention, batched over all heads (operands arrive head-split) ----
    # TODO(synk): chunk over head groups / K blocks for very long T (bounds the
    #             (H, TQ, T) f32 live intermediate on v7x).
    s = jnp.einsum("hqd,hkd->hqk", q3, k3, preferred_element_type=f32)  # (H,TQ,T)
    s = jnp.where(masked[None], jnp.float32(-1e18), s)
    m = jnp.max(s, axis=-1, keepdims=True)
    if fast_exp:                                   # optional: bf16 EUP exp (v6e/v7x)
        e = jnp.exp((s - m).astype(jnp.bfloat16)).astype(f32)
    else:
        e = jnp.exp(s - m)
    denom = jnp.sum(e, axis=-1, keepdims=True)

    # head 0 == top_attn: exact normalization (rows sum to 1), bf16 HBM write
    attn_ref[0] = (e[0] / denom[0]).astype(attn_ref.dtype)
    # P*V path: approx reciprocal on the EUP slot (nearly free)
    p = (e * pl.reciprocal(denom, approx=True)).astype(cdt)

    ctx3 = jnp.einsum("hqk,hkd->hqd", p, v3, preferred_element_type=f32)  # (H,TQ,dh)

    # ---- output projection: per-head accumulating 2-D matmuls (no concat) ----
    sa = jnp.zeros((TQ, D), f32)
    for h in range(heads):
        sa = sa + jnp.dot(ctx3[h].astype(cdt), wo_ref[h],
                          preferred_element_type=f32)
    query = sa + x_q                               # residual (dropout = identity)

    # ---- PositionwiseFeedForward: LN -> W1 -> ReLU -> W2 -> +residual ----
    mu = jnp.mean(query, axis=-1, keepdims=True)
    var = jnp.mean((query - mu) ** 2, axis=-1, keepdims=True)
    qn = ((query - mu) * jax.lax.rsqrt(var + eps)
          * ln2_g_ref[...] + ln2_b_ref[...]).astype(cdt)

    F = w1_ref.shape[1]
    n_ff = F // ff_chunk                           # wrapper guarantees divisibility

    def ff_body(c, acc):
        c0 = pl.multiple_of(c * ff_chunk, ff_chunk)
        h1 = jnp.dot(qn, w1_ref[:, pl.ds(c0, ff_chunk)], preferred_element_type=f32)
        h1 = jnp.maximum(h1 + b1_ref[:, pl.ds(c0, ff_chunk)], 0.0).astype(cdt)
        return acc + jnp.dot(h1, w2_ref[pl.ds(c0, ff_chunk), :],
                             preferred_element_type=f32)

    ff = jax.lax.fori_loop(0, n_ff, ff_body, jnp.zeros((TQ, D), f32), unroll=True)

    out_ref[0] = (ff + b2_ref[...] + query).astype(out_ref.dtype)


# ---------------------------------------------------------------- wrapper -------
def _vmem_limit_bytes():
    # Explicit scoped-VMEM limit (default is only 16/32 MiB); leave headroom below
    # the physical capacity (64 MiB on v7x, 128 MiB on v5e/v6e).
    try:
        cap = pltpu.get_tpu_info().vmem_capacity_bytes
    except Exception:
        cap = 64 * 1024 * 1024
    return int(cap * 3 // 4)


def _fixed_spec(shape, single_buffer):
    """Resident (un-tiled) parameter block; optionally single-buffered."""
    index_map = lambda *_: (0,) * len(shape)
    if single_buffer:
        return pl.BlockSpec(shape, index_map, pipeline_mode=pl.Buffered(1))
    return pl.BlockSpec(shape, index_map)


def _decoder_layer_impl(x, tgt_pad_mask, params, heads, *, tq, ts, future,
                        compute_dtype, ff_chunk, attn_dtype, fast_exp,
                        single_buffer_weights):
    B, T, D = x.shape
    F = params["w1"].shape[1]
    assert D % heads == 0
    dh = D // heads

    if tq is None:
        tq = min(T, 256)
    assert T % tq == 0, "query tile must divide T"
    nq = T // tq
    if ts is None:
        ts = min(T, 512)
    if T % ts != 0:
        ts = T
    ns = T // ts
    ff_chunk = min(ff_chunk, F)
    if F % ff_chunk != 0:
        ff_chunk = F

    f32 = jnp.float32
    cdt = compute_dtype
    itm = jnp.dtype(cdt).itemsize
    attn_itm = jnp.dtype(attn_dtype).itemsize

    # ---- host-side weight prep (free, static) ----
    scale = 1.0 / (dh ** 0.5)
    wq = (params["wq"] * scale).astype(cdt)              # 1/sqrt(dh) folded into Wq
    wk = params["wk"].astype(cdt)
    wv = params["wv"].astype(cdt)
    wo3 = params["wo"].reshape(heads, dh, D).astype(cdt) # pre-split output proj
    w1 = params["w1"].astype(cdt)
    w2 = params["w2"].astype(cdt)
    ln1_g = params["ln1_g"].astype(f32).reshape(1, D)
    ln1_b = params["ln1_b"].astype(f32).reshape(1, D)
    ln2_g = params["ln2_g"].astype(f32).reshape(1, D)
    ln2_b = params["ln2_b"].astype(f32).reshape(1, D)
    b1 = params["b1"].astype(f32).reshape(1, F)
    b2 = params["b2"].astype(f32).reshape(1, D)

    x32 = x.astype(f32)
    pad = tgt_pad_mask.astype(f32).reshape(B, 1, T)

    fixed = lambda shape: _fixed_spec(shape, single_buffer_weights)
    cparams = pltpu.CompilerParams(
        dimension_semantics=("parallel", "parallel"),
        vmem_limit_bytes=_vmem_limit_bytes(),
    )

    # ---- kernel 1: LN1 + QKV projections, once per sequence position ----
    qkv_grid = pltpu.PrefetchScalarGridSpec(
        num_scalar_prefetch=0,
        grid=(B, ns),
        in_specs=[
            pl.BlockSpec((1, ts, D), lambda b, s: (b, s, 0)),        # x seq tile
            fixed((1, D)), fixed((1, D)),                            # LN1 gamma/beta
            fixed((D, D)), fixed((D, D)), fixed((D, D)),             # Wq Wk Wv
        ],
        out_specs=[
            pl.BlockSpec((1, heads, ts, dh), lambda b, s: (b, 0, s, 0)),
            pl.BlockSpec((1, heads, ts, dh), lambda b, s: (b, 0, s, 0)),
            pl.BlockSpec((1, heads, ts, dh), lambda b, s: (b, 0, s, 0)),
        ],
    )
    cost_qkv = pl.CostEstimate(
        flops=int(6 * B * T * D * D),
        transcendentals=int(B * T),
        bytes_accessed=int(B * T * D * 4 + 3 * B * T * D * itm + 3 * D * D * itm),
    )
    q3, k3, v3 = pl.pallas_call(
        functools.partial(qkv_project_kernel, heads=heads),
        out_shape=(
            jax.ShapeDtypeStruct((B, heads, T, dh), cdt),
            jax.ShapeDtypeStruct((B, heads, T, dh), cdt),
            jax.ShapeDtypeStruct((B, heads, T, dh), cdt),
        ),
        grid_spec=qkv_grid,
        compiler_params=cparams,
        cost_estimate=cost_qkv,
    )(x32, ln1_g, ln1_b, wq, wk, wv)

    # ---- kernel 2: masked attention + output proj + FFN, per query tile ----
    attn_grid = pltpu.PrefetchScalarGridSpec(
        num_scalar_prefetch=0,
        grid=(B, nq),
        in_specs=[
            pl.BlockSpec((1, 1, T), lambda b, q: (b, 0, 0)),              # pad row
            pl.BlockSpec((1, tq, D), lambda b, q: (b, q, 0)),             # x (residual)
            pl.BlockSpec((1, heads, tq, dh), lambda b, q: (b, 0, q, 0)),  # Q tile
            pl.BlockSpec((1, heads, T, dh), lambda b, q: (b, 0, 0, 0)),   # K full seq
            pl.BlockSpec((1, heads, T, dh), lambda b, q: (b, 0, 0, 0)),   # V full seq
            fixed((heads, dh, D)),                                        # Wo (pre-split)
            fixed((1, D)), fixed((1, D)),                                 # LN2 gamma/beta
            fixed((D, F)), fixed((1, F)),                                 # W1, b1
            fixed((F, D)), fixed((1, D)),                                 # W2, b2
        ],
        out_specs=[
            pl.BlockSpec((1, tq, D), lambda b, q: (b, q, 0)),             # layer_out
            pl.BlockSpec((1, tq, T), lambda b, q: (b, q, 0)),             # top_attn
        ],
    )
    cost_attn = pl.CostEstimate(
        flops=int(B * (4 * heads * T * T * dh + 2 * T * D * D + 4 * T * D * F)),
        transcendentals=int(B * heads * T * T),
        bytes_accessed=int(B * (T * D * 4 + heads * T * dh * itm
                                + nq * 2 * heads * T * dh * itm
                                + T * D * 4 + T * T * attn_itm)
                           + (heads * dh * D + 2 * D * F) * itm
                           + (4 * D + F) * 4),
    )
    layer_out, top_attn = pl.pallas_call(
        functools.partial(attn_ffn_kernel, heads=heads, future=future,
                          ff_chunk=ff_chunk, fast_exp=fast_exp),
        out_shape=(
            jax.ShapeDtypeStruct((B, T, D), jnp.float32),
            jax.ShapeDtypeStruct((B, T, T), attn_dtype),
        ),
        grid_spec=attn_grid,
        compiler_params=cparams,
        cost_estimate=cost_attn,
    )(pad, x32, q3, k3, v3, wo3, ln2_g, ln2_b, w1, b1, w2, b2)

    # TODO(synk): with_align=True second (future-aware) forward pass and
    #             alignment-head averaging are not implemented (module defaults off).
    attn_align = None
    return layer_out, top_attn, attn_align


def transformer_decoder_layer(x, tgt_pad_mask, params, heads, *, tq=None, ts=None,
                              future=False, compute_dtype=jnp.bfloat16,
                              ff_chunk=512, attn_dtype=jnp.bfloat16,
                              fast_exp=False, single_buffer_weights=True):
    """x: (B, T, D) f32; tgt_pad_mask: (B, 1, T), nonzero/True = padding."""
    kwargs = dict(tq=tq, ts=ts, future=future, compute_dtype=compute_dtype,
                  ff_chunk=ff_chunk, attn_dtype=attn_dtype, fast_exp=fast_exp,
                  single_buffer_weights=single_buffer_weights)
    try:
        return _decoder_layer_impl(x, tgt_pad_mask, params, heads, **kwargs)
    except Exception:
        # pipeline_mode=pl.Buffered(1) on resident weights is a perf hint only;
        # fall back to default double-buffering if this JAX build rejects it.
        if not single_buffer_weights:
            raise
        kwargs["single_buffer_weights"] = False
        return _decoder_layer_impl(x, tgt_pad_mask, params, heads, **kwargs)


# ---------------------------------------------------------- JAX reference -------
def ref_layer(x, tgt_pad_mask, p, heads, future=False):
    def ln(v, g, b):
        mu = v.mean(-1, keepdims=True)
        var = ((v - mu) ** 2).mean(-1, keepdims=True)
        return (v - mu) / jnp.sqrt(var + 1e-6) * g + b

    B, T, D = x.shape
    dh = D // heads
    if not future:
        fut = jnp.triu(jnp.ones((T, T), jnp.bool_), k=1)[None]
        dec_mask = tgt_pad_mask.astype(jnp.bool_) | fut          # (B, T, T)
    else:
        dec_mask = jnp.broadcast_to(tgt_pad_mask.astype(jnp.bool_), (B, T, T))

    xn = ln(x, p["ln1_g"][0], p["ln1_b"][0])
    q, k, v = xn @ p["wq"], xn @ p["wk"], xn @ p["wv"]
    split = lambda t: t.reshape(B, T, heads, dh).transpose(0, 2, 1, 3)
    qh, kh, vh = split(q) / jnp.sqrt(jnp.float32(dh)), split(k), split(v)
    scores = jnp.einsum("bhqd,bhkd->bhqk", qh, kh)
    scores = jnp.where(dec_mask[:, None], -1e18, scores)
    attn = jax.nn.softmax(scores, axis=-1)
    ctx = jnp.einsum("bhqk,bhkd->bhqd", attn, vh).transpose(0, 2, 1, 3).reshape(B, T, D)
    query = ctx @ p["wo"] + x
    qn = ln(query, p["ln2_g"][0], p["ln2_b"][0])
    ff = jnp.maximum(qn @ p["w1"] + p["b1"][0], 0.0) @ p["w2"] + p["b2"][0]
    return ff + query, attn


# ------------------------------------------------------------------- main -------
if __name__ == "__main__":
    B, T, D, H, F = 2, 16, 64, 4, 128   # batch, seq, d_model, heads, d_ff
    TQ = 8                              # query tile -> attention grid (B, T//TQ) = (2, 2)

    key = jax.random.PRNGKey(0)
    ks = jax.random.split(key, 10)
    init = lambda k, shape: 0.02 * jax.random.normal(k, shape, jnp.float32)

    params = {
        "wq": init(ks[0], (D, D)),
        "wk": init(ks[1], (D, D)),
        "wv": init(ks[2], (D, D)),
        "wo": init(ks[3], (D, D)),
        "ln1_g": jnp.ones((1, D), jnp.float32),
        "ln1_b": jnp.zeros((1, D), jnp.float32),
        "ln2_g": jnp.ones((1, D), jnp.float32),
        "ln2_b": jnp.zeros((1, D), jnp.float32),
        "w1": init(ks[4], (D, F)),
        "b1": init(ks[5], (1, F)),
        "w2": init(ks[6], (F, D)),
        "b2": init(ks[7], (1, D)),
    }

    x = jax.random.normal(ks[8], (B, T, D), jnp.float32)
    # padding mask: True where padded (last 3 positions of batch element 1)
    lengths = jnp.array([T, T - 3], jnp.int32)
    tgt_pad_mask = (jnp.arange(T)[None, None, :] >= lengths[:, None, None])  # (B,1,T)

    layer_out, top_attn, attn_align = transformer_decoder_layer(
        x, tgt_pad_mask, params, heads=H, tq=TQ
    )
    jax.block_until_ready((layer_out, top_attn))

    # verify against pure-JAX f32 reference (kernel uses bf16 MXU + approx recip)
    ref_out, ref_attn = ref_layer(x, tgt_pad_mask, params, H)
    assert layer_out.shape == (B, T, D)
    assert top_attn.shape == (B, T, T)
    assert attn_align is None
    top_attn32 = top_attn.astype(jnp.float32)
    err_out = float(jnp.max(jnp.abs(layer_out - ref_out)))
    err_att = float(jnp.max(jnp.abs(top_attn32 - ref_attn[:, 0])))
    assert jnp.allclose(layer_out, ref_out, atol=2e-2, rtol=2e-2), err_out
    assert jnp.allclose(top_attn32, ref_attn[:, 0], atol=1e-2, rtol=5e-2), err_att

    print("KERNEL_OK")
</pallas_src>

<mosaic_0001>
module attributes {stable_mosaic.version = 11 : i64} {
  func.func @qkv_project_kernel(%arg0: i32, %arg1: i32, %arg2: memref<1x16x64xf32, #tpu.memory_space<vmem>>, %arg3: memref<1x64xf32, #tpu.memory_space<vmem>>, %arg4: memref<1x64xf32, #tpu.memory_space<vmem>>, %arg5: memref<64x64xbf16, #tpu.memory_space<vmem>>, %arg6: memref<64x64xbf16, #tpu.memory_space<vmem>>, %arg7: memref<64x64xbf16, #tpu.memory_space<vmem>>, %arg8: memref<1x4x16x16xbf16, #tpu.memory_space<vmem>>, %arg9: memref<1x4x16x16xbf16, #tpu.memory_space<vmem>>, %arg10: memref<1x4x16x16xbf16, #tpu.memory_space<vmem>>) attributes {dimension_semantics = [#tpu.dimension_semantics<parallel>, #tpu.dimension_semantics<parallel>], iteration_bounds = array<i64: 2, 1>, scalar_prefetch = 0 : i64, scratch_operands = 0 : i64, tpu.core_type = #tpu.core_type<tc>, window_params = [{transform_indices = @transform_0, window_bounds = array<i64: 1, 16, 64>}, {pipeline_mode = #tpu.pipeline_mode<synchronous>, transform_indices = @transform_1, window_bounds = array<i64: 1, 64>}, {pipeline_mode = #tpu.pipeline_mode<synchronous>, transform_indices = @transform_2, window_bounds = array<i64: 1, 64>}, {pipeline_mode = #tpu.pipeline_mode<synchronous>, transform_indices = @transform_3, window_bounds = array<i64: 64, 64>}, {pipeline_mode = #tpu.pipeline_mode<synchronous>, transform_indices = @transform_4, window_bounds = array<i64: 64, 64>}, {pipeline_mode = #tpu.pipeline_mode<synchronous>, transform_indices = @transform_5, window_bounds = array<i64: 64, 64>}, {transform_indices = @transform_6, window_bounds = array<i64: 1, 4, 16, 16>}, {transform_indices = @transform_7, window_bounds = array<i64: 1, 4, 16, 16>}, {transform_indices = @transform_8, window_bounds = array<i64: 1, 4, 16, 16>}]} {
    %c0 = arith.constant 0 : index
    %c0_0 = arith.constant 0 : index
    %c0_1 = arith.constant 0 : index
    %0 = vector.load %arg2[%c0, %c0_0, %c0_1] : memref<1x16x64xf32, #tpu.memory_space<vmem>>, vector<1x16x64xf32>
    %1 = vector.shape_cast %0 : vector<1x16x64xf32> to vector<16x64xf32>
    %cst = arith.constant dense<0.000000e+00> : vector<16xf32>
    %2 = vector.multi_reduction <add>, %1, %cst [1] : vector<16x64xf32> to vector<16xf32>
    %3 = vector.shape_cast %2 : vector<16xf32> to vector<16x1xf32>
    %cst_2 = arith.constant 6.400000e+01 : f32
    %4 = vector.broadcast %cst_2 : f32 to vector<16x1xf32>
    %5 = arith.divf %3, %4 : vector<16x1xf32>
    %6 = vector.broadcast %5 : vector<16x1xf32> to vector<16x64xf32>
    %7 = arith.subf %1, %6 : vector<16x64xf32>
    %8 = arith.mulf %7, %7 : vector<16x64xf32>
    %cst_3 = arith.constant dense<0.000000e+00> : vector<16xf32>
    %9 = vector.multi_reduction <add>, %8, %cst_3 [1] : vector<16x64xf32> to vector<16xf32>
    %10 = vector.shape_cast %9 : vector<16xf32> to vector<16x1xf32>
    %cst_4 = arith.constant 6.400000e+01 : f32
    %11 = vector.broadcast %cst_4 : f32 to vector<16x1xf32>
    %12 = arith.divf %10, %11 : vector<16x1xf32>
    %13 = vector.broadcast %5 : vector<16x1xf32> to vector<16x64xf32>
    %14 = arith.subf %1, %13 : vector<16x64xf32>
    %cst_5 = arith.constant 9.99999997E-7 : f32
    %15 = vector.broadcast %cst_5 : f32 to vector<16x1xf32>
    %16 = arith.addf %12, %15 : vector<16x1xf32>
    %17 = math.rsqrt %16 : vector<16x1xf32>
    %18 = vector.broadcast %17 : vector<16x1xf32> to vector<16x64xf32>
    %19 = arith.mulf %14, %18 : vector<16x64xf32>
    %c0_6 = arith.constant 0 : index
    %c0_7 = arith.constant 0 : index
    %20 = vector.load %arg3[%c0_6, %c0_7] : memref<1x64xf32, #tpu.memory_space<vmem>>, vector<1x64xf32>
    %21 = vector.broadcast %20 : vector<1x64xf32> to vector<16x64xf32>
    %22 = arith.mulf %19, %21 : vector<16x64xf32>
    %c0_8 = arith.constant 0 : index
    %c0_9 = arith.constant 0 : index
    %23 = vector.load %arg4[%c0_8, %c0_9] : memref<1x64xf32, #tpu.memory_space<vmem>>, vector<1x64xf32>
    %24 = vector.broadcast %23 : vector<1x64xf32> to vector<16x64xf32>
    %25 = arith.addf %22, %24 : vector<16x64xf32>
    %26 = arith.truncf %25 : vector<16x64xf32> to vector<16x64xbf16>
    %c0_10 = arith.constant 0 : index
    %c0_11 = arith.constant 0 : index
    %27 = vector.load %arg5[%c0_10, %c0_11] : memref<64x64xbf16, #tpu.memory_space<vmem>>, vector<64x64xbf16>
    %cst_12 = arith.constant dense<0.000000e+00> : vector<16x64xf32>
    %28 = tpu.matmul %26, %27, %cst_12 {dimension_numbers = #tpu.dot_dimension_numbers<[1], [0], [0], [1], [0, 0, 1, 1], [], []>} : vector<16x64xbf16>, vector<64x64xbf16>, vector<16x64xf32> -> vector<16x64xf32>
    %c0_13 = arith.constant 0 : index
    %c0_14 = arith.constant 0 : index
    %29 = vector.load %arg6[%c0_13, %c0_14] : memref<64x64xbf16, #tpu.memory_space<vmem>>, vector<64x64xbf16>
    %cst_15 = arith.constant dense<0.000000e+00> : vector<16x64xf32>
    %30 = tpu.matmul %26, %29, %cst_15 {dimension_numbers = #tpu.dot_dimension_numbers<[1], [0], [0], [1], [0, 0, 1, 1], [], []>} : vector<16x64xbf16>, vector<64x64xbf16>, vector<16x64xf32> -> vector<16x64xf32>
    %c0_16 = arith.constant 0 : index
    %c0_17 = arith.constant 0 : index
    %31 = vector.load %arg7[%c0_16, %c0_17] : memref<64x64xbf16, #tpu.memory_space<vmem>>, vector<64x64xbf16>
    %cst_18 = arith.constant dense<0.000000e+00> : vector<16x64xf32>
    %32 = tpu.matmul %26, %31, %cst_18 {dimension_numbers = #tpu.dot_dimension_numbers<[1], [0], [0], [1], [0, 0, 1, 1], [], []>} : vector<16x64xbf16>, vector<64x64xbf16>, vector<16x64xf32> -> vector<16x64xf32>
    %33 = vector.extract_strided_slice %28 {offsets = [0, 0], sizes = [16, 16], strides = [1, 1]} : vector<16x64xf32> to vector<16x16xf32>
    %34 = arith.truncf %33 : vector<16x16xf32> to vector<16x16xbf16>
    %c0_19 = arith.constant 0 : index
    %c0_20 = arith.constant 0 : index
    %c0_21 = arith.constant 0 : index
    %c0_22 = arith.constant 0 : index
    %35 = vector.load %arg8[%c0_19, %c0_20, %c0_21, %c0_22] : memref<1x4x16x16xbf16, #tpu.memory_space<vmem>>, vector<1x1x16x16xbf16>
    %36 = vector.shape_cast %35 : vector<1x1x16x16xbf16> to vector<16x16xbf16>
    %37 = vector.shape_cast %34 : vector<16x16xbf16> to vector<1x1x16x16xbf16>
    tpu.vector_store %arg8[%c0_19, %c0_20, %c0_21, %c0_22], %37 {strides = array<i32>} : memref<1x4x16x16xbf16, #tpu.memory_space<vmem>>, vector<1x1x16x16xbf16>,
    %38 = vector.extract_strided_slice %30 {offsets = [0, 0], sizes = [16, 16], strides = [1, 1]} : vector<16x64xf32> to vector<16x16xf32>
    %39 = arith.truncf %38 : vector<16x16xf32> to vector<16x16xbf16>
    %c0_23 = arith.constant 0 : index
    %c0_24 = arith.constant 0 : index
    %c0_25 = arith.constant 0 : index
    %c0_26 = arith.constant 0 : index
    %40 = vector.load %arg9[%c0_23, %c0_24, %c0_25, %c0_26] : memref<1x4x16x16xbf16, #tpu.memory_space<vmem>>, vector<1x1x16x16xbf16>
    %41 = vector.shape_cast %40 : vector<1x1x16x16xbf16> to vector<16x16xbf16>
    %42 = vector.shape_cast %39 : vector<16x16xbf16> to vector<1x1x16x16xbf16>
    tpu.vector_store %arg9[%c0_23, %c0_24, %c0_25, %c0_26], %42 {strides = array<i32>} : memref<1x4x16x16xbf16, #tpu.memory_space<vmem>>, vector<1x1x16x16xbf16>,
    %43 = vector.extract_strided_slice %32 {offsets = [0, 0], sizes = [16, 16], strides = [1, 1]} : vector<16x64xf32> to vector<16x16xf32>
    %44 = arith.truncf %43 : vector<16x16xf32> to vector<16x16xbf16>
    %c0_27 = arith.constant 0 : index
    %c0_28 = arith.constant 0 : index
    %c0_29 = arith.constant 0 : index
    %c0_30 = arith.constant 0 : index
    %45 = vector.load %arg10[%c0_27, %c0_28, %c0_29, %c0_30] : memref<1x4x16x16xbf16, #tpu.memory_space<vmem>>, vector<1x1x16x16xbf16>
    %46 = vector.shape_cast %45 : vector<1x1x16x16xbf16> to vector<16x16xbf16>
    %47 = vector.shape_cast %44 : vector<16x16xbf16> to vector<1x1x16x16xbf16>
    tpu.vector_store %arg10[%c0_27, %c0_28, %c0_29, %c0_30], %47 {strides = array<i32>} : memref<1x4x16x16xbf16, #tpu.memory_space<vmem>>, vector<1x1x16x16xbf16>,
    %48 = vector.extract_strided_slice %28 {offsets = [0, 16], sizes = [16, 16], strides = [1, 1]} : vector<16x64xf32> to vector<16x16xf32>
    %49 = arith.truncf %48 : vector<16x16xf32> to vector<16x16xbf16>
    %c0_31 = arith.constant 0 : index
    %c1 = arith.constant 1 : index
    %c0_32 = arith.constant 0 : index
    %c0_33 = arith.constant 0 : index
    %50 = vector.load %arg8[%c0_31, %c1, %c0_32, %c0_33] : memref<1x4x16x16xbf16, #tpu.memory_space<vmem>>, vector<1x1x16x16xbf16>
    %51 = vector.shape_cast %50 : vector<1x1x16x16xbf16> to vector<16x16xbf16>
    %52 = vector.shape_cast %49 : vector<16x16xbf16> to vector<1x1x16x16xbf16>
    tpu.vector_store %arg8[%c0_31, %c1, %c0_32, %c0_33], %52 {strides = array<i32>} : memref<1x4x16x16xbf16, #tpu.memory_space<vmem>>, vector<1x1x16x16xbf16>,
    %53 = vector.extract_strided_slice %30 {offsets = [0, 16], sizes = [16, 16], strides = [1, 1]} : vector<16x64xf32> to vector<16x16xf32>
    %54 = arith.truncf %53 : vector<16x16xf32> to vector<16x16xbf16>
    %c0_34 = arith.constant 0 : index
    %c1_35 = arith.constant 1 : index
    %c0_36 = arith.constant 0 : index
    %c0_37 = arith.constant 0 : index
    %55 = vector.load %arg9[%c0_34, %c1_35, %c0_36, %c0_37] : memref<1x4x16x16xbf16, #tpu.memory_space<vmem>>, vector<1x1x16x16xbf16>
    %56 = vector.shape_cast %55 : vector<1x1x16x16xbf16> to vector<16x16xbf16>
    %57 = vector.shape_cast %54 : vector<16x16xbf16> to vector<1x1x16x16xbf16>
    tpu.vector_store %arg9[%c0_34, %c1_35, %c0_36, %c0_37], %57 {strides = array<i32>} : memref<1x4x16x16xbf16, #tpu.memory_space<vmem>>, vector<1x1x16x16xbf16>,
    %58 = vector.extract_strided_slice %32 {offsets = [0, 16], sizes = [16, 16], strides = [1, 1]} : vector<16x64xf32> to vector<16x16xf32>
    %59 = arith.truncf %58 : vector<16x16xf32> to vector<16x16xbf16>
    %c0_38 = arith.constant 0 : index
    %c1_39 = arith.constant 1 : index
    %c0_40 = arith.constant 0 : index
    %c0_41 = arith.constant 0 : index
    %60 = vector.load %arg10[%c0_38, %c1_39, %c0_40, %c0_41] : memref<1x4x16x16xbf16, #tpu.memory_space<vmem>>, vector<1x1x16x16xbf16>
    %61 = vector.shape_cast %60 : vector<1x1x16x16xbf16> to vector<16x16xbf16>
    %62 = vector.shape_cast %59 : vector<16x16xbf16> to vector<1x1x16x16xbf16>
    tpu.vector_store %arg10[%c0_38, %c1_39, %c0_40, %c0_41], %62 {strides = array<i32>} : memref<1x4x16x16xbf16, #tpu.memory_space<vmem>>, vector<1x1x16x16xbf16>,
    %63 = vector.extract_strided_slice %28 {offsets = [0, 32], sizes = [16, 16], strides = [1, 1]} : vector<16x64xf32> to vector<16x16xf32>
    %64 = arith.truncf %63 : vector<16x16xf32> to vector<16x16xbf16>
    %c0_42 = arith.constant 0 : index
    %c2 = arith.constant 2 : index
    %c0_43 = arith.constant 0 : index
    %c0_44 = arith.constant 0 : index
    %65 = vector.load %arg8[%c0_42, %c2, %c0_43, %c0_44] : memref<1x4x16x16xbf16, #tpu.memory_space<vmem>>, vector<1x1x16x16xbf16>
    %66 = vector.shape_cast %65 : vector<1x1x16x16xbf16> to vector<16x16xbf16>
    %67 = vector.shape_cast %64 : vector<16x16xbf16> to vector<1x1x16x16xbf16>
    tpu.vector_store %arg8[%c0_42, %c2, %c0_43, %c0_44], %67 {strides = array<i32>} : memref<1x4x16x16xbf16, #tpu.memory_space<vmem>>, vector<1x1x16x16xbf16>,
    %68 = vector.extract_strided_slice %30 {offsets = [0, 32], sizes = [16, 16], strides = [1, 1]} : vector<16x64xf32> to vector<16x16xf32>
    %69 = arith.truncf %68 : vector<16x16xf32> to vector<16x16xbf16>
    %c0_45 = arith.constant 0 : index
    %c2_46 = arith.constant 2 : index
    %c0_47 = arith.constant 0 : index
    %c0_48 = arith.constant 0 : index
    %70 = vector.load %arg9[%c0_45, %c2_46, %c0_47, %c0_48] : memref<1x4x16x16xbf16, #tpu.memory_space<vmem>>, vector<1x1x16x16xbf16>
    %71 = vector.shape_cast %70 : vector<1x1x16x16xbf16> to vector<16x16xbf16>
    %72 = vector.shape_cast %69 : vector<16x16xbf16> to vector<1x1x16x16xbf16>
    tpu.vector_store %arg9[%c0_45, %c2_46, %c0_47, %c0_48], %72 {strides = array<i32>} : memref<1x4x16x16xbf16, #tpu.memory_space<vmem>>, vector<1x1x16x16xbf16>,
    %73 = vector.extract_strided_slice %32 {offsets = [0, 32], sizes = [16, 16], strides = [1, 1]} : vector<16x64xf32> to vector<16x16xf32>
    %74 = arith.truncf %73 : vector<16x16xf32> to vector<16x16xbf16>
    %c0_49 = arith.constant 0 : index
    %c2_50 = arith.constant 2 : index
    %c0_51 = arith.constant 0 : index
    %c0_52 = arith.constant 0 : index
    %75 = vector.load %arg10[%c0_49, %c2_50, %c0_51, %c0_52] : memref<1x4x16x16xbf16, #tpu.memory_space<vmem>>, vector<1x1x16x16xbf16>
    %76 = vector.shape_cast %75 : vector<1x1x16x16xbf16> to vector<16x16xbf16>
    %77 = vector.shape_cast %74 : vector<16x16xbf16> to vector<1x1x16x16xbf16>
    tpu.vector_store %arg10[%c0_49, %c2_50, %c0_51, %c0_52], %77 {strides = array<i32>} : memref<1x4x16x16xbf16, #tpu.memory_space<vmem>>, vector<1x1x16x16xbf16>,
    %78 = vector.extract_strided_slice %28 {offsets = [0, 48], sizes = [16, 16], strides = [1, 1]} : vector<16x64xf32> to vector<16x16xf32>
    %79 = arith.truncf %78 : vector<16x16xf32> to vector<16x16xbf16>
    %c0_53 = arith.constant 0 : index
    %c3 = arith.constant 3 : index
    %c0_54 = arith.constant 0 : index
    %c0_55 = arith.constant 0 : index
    %80 = vector.load %arg8[%c0_53, %c3, %c0_54, %c0_55] : memref<1x4x16x16xbf16, #tpu.memory_space<vmem>>, vector<1x1x16x16xbf16>
    %81 = vector.shape_cast %80 : vector<1x1x16x16xbf16> to vector<16x16xbf16>
    %82 = vector.shape_cast %79 : vector<16x16xbf16> to vector<1x1x16x16xbf16>
    tpu.vector_store %arg8[%c0_53, %c3, %c0_54, %c0_55], %82 {strides = array<i32>} : memref<1x4x16x16xbf16, #tpu.memory_space<vmem>>, vector<1x1x16x16xbf16>,
    %83 = vector.extract_strided_slice %30 {offsets = [0, 48], sizes = [16, 16], strides = [1, 1]} : vector<16x64xf32> to vector<16x16xf32>
    %84 = arith.truncf %83 : vector<16x16xf32> to vector<16x16xbf16>
    %c0_56 = arith.constant 0 : index
    %c3_57 = arith.constant 3 : index
    %c0_58 = arith.constant 0 : index
    %c0_59 = arith.constant 0 : index
    %85 = vector.load %arg9[%c0_56, %c3_57, %c0_58, %c0_59] : memref<1x4x16x16xbf16, #tpu.memory_space<vmem>>, vector<1x1x16x16xbf16>
    %86 = vector.shape_cast %85 : vector<1x1x16x16xbf16> to vector<16x16xbf16>
    %87 = vector.shape_cast %84 : vector<16x16xbf16> to vector<1x1x16x16xbf16>
    tpu.vector_store %arg9[%c0_56, %c3_57, %c0_58, %c0_59], %87 {strides = array<i32>} : memref<1x4x16x16xbf16, #tpu.memory_space<vmem>>, vector<1x1x16x16xbf16>,
    %88 = vector.extract_strided_slice %32 {offsets = [0, 48], sizes = [16, 16], strides = [1, 1]} : vector<16x64xf32> to vector<16x16xf32>
    %89 = arith.truncf %88 : vector<16x16xf32> to vector<16x16xbf16>
    %c0_60 = arith.constant 0 : index
    %c3_61 = arith.constant 3 : index
    %c0_62 = arith.constant 0 : index
    %c0_63 = arith.constant 0 : index
    %90 = vector.load %arg10[%c0_60, %c3_61, %c0_62, %c0_63] : memref<1x4x16x16xbf16, #tpu.memory_space<vmem>>, vector<1x1x16x16xbf16>
    %91 = vector.shape_cast %90 : vector<1x1x16x16xbf16> to vector<16x16xbf16>
    %92 = vector.shape_cast %89 : vector<16x16xbf16> to vector<1x1x16x16xbf16>
    tpu.vector_store %arg10[%c0_60, %c3_61, %c0_62, %c0_63], %92 {strides = array<i32>} : memref<1x4x16x16xbf16, #tpu.memory_space<vmem>>, vector<1x1x16x16xbf16>,
    return
  }
  func.func @transform_0(%arg0: i32, %arg1: i32) -> (i32, i32, i32) {
    %c0_i32 = arith.constant 0 : i32
    %c0_i32_0 = arith.constant 0 : i32
    return %arg0, %arg1, %c0_i32 : i32, i32, i32
  }
  func.func @transform_1(%arg0: i32, %arg1: i32) -> (i32, i32) {
    %c0_i32 = arith.constant 0 : i32
    %c0_i32_0 = arith.constant 0 : i32
    %c0_i32_1 = arith.constant 0 : i32
    return %c0_i32, %c0_i32_0 : i32, i32
  }
  func.func @transform_2(%arg0: i32, %arg1: i32) -> (i32, i32) {
    %c0_i32 = arith.constant 0 : i32
    %c0_i32_0 = arith.constant 0 : i32
    %c0_i32_1 = arith.constant 0 : i32
    return %c0_i32, %c0_i32_0 : i32, i32
  }
  func.func @transform_3(%arg0: i32, %arg1: i32) -> (i32, i32) {
    %c0_i32 = arith.constant 0 : i32
    %c0_i32_0 = arith.constant 0 : i32
    %c0_i32_1 = arith.constant 0 : i32
    return %c0_i32, %c0_i32_0 : i32, i32
  }
  func.func @transform_4(%arg0: i32, %arg1: i32) -> (i32, i32) {
    %c0_i32 = arith.constant 0 : i32
    %c0_i32_0 = arith.constant 0 : i32
    %c0_i32_1 = arith.constant 0 : i32
    return %c0_i32, %c0_i32_0 : i32, i32
  }
  func.func @transform_5(%arg0: i32, %arg1: i32) -> (i32, i32) {
    %c0_i32 = arith.constant 0 : i32
    %c0_i32_0 = arith.constant 0 : i32
    %c0_i32_1 = arith.constant 0 : i32
    return %c0_i32, %c0_i32_0 : i32, i32
  }
  func.func @transform_6(%arg0: i32, %arg1: i32) -> (i32, i32, i32, i32) {
    %c0_i32 = arith.constant 0 : i32
    %c0_i32_0 = arith.constant 0 : i32
    %c0_i32_1 = arith.constant 0 : i32
    return %arg0, %c0_i32, %arg1, %c0_i32_0 : i32, i32, i32, i32
  }
  func.func @transform_7(%arg0: i32, %arg1: i32) -> (i32, i32, i32, i32) {
    %c0_i32 = arith.constant 0 : i32
    %c0_i32_0 = arith.constant 0 : i32
    %c0_i32_1 = arith.constant 0 : i32
    return %arg0, %c0_i32, %arg1, %c0_i32_0 : i32, i32, i32, i32
  }
  func.func @transform_8(%arg0: i32, %arg1: i32) -> (i32, i32, i32, i32) {
    %c0_i32 = arith.constant 0 : i32
    %c0_i32_0 = arith.constant 0 : i32
    %c0_i32_1 = arith.constant 0 : i32
    return %arg0, %c0_i32, %arg1, %c0_i32_0 : i32, i32, i32, i32
  }
}

module attributes {stable_mosaic.version = 11 : i64} {
  func.func @qkv_project_kernel(%arg0: i32, %arg1: i32, %arg2: memref<1x16x64xf32, #tpu.memory_space<vmem>>, %arg3: memref<1x64xf32, #tpu.memory_space<vmem>>, %arg4: memref<1x64xf32, #tpu.memory_space<vmem>>, %arg5: memref<64x64xbf16, #tpu.memory_space<vmem>>, %arg6: memref<64x64xbf16, #tpu.memory_space<vmem>>, %arg7: memref<64x64xbf16, #tpu.memory_space<vmem>>, %arg8: memref<1x4x16x16xbf16, #tpu.memory_space<vmem>>, %arg9: memref<1x4x16x16xbf16, #tpu.memory_space<vmem>>, %arg10: memref<1x4x16x16xbf16, #tpu.memory_space<vmem>>) attributes {dimension_semantics = [#tpu.dimension_semantics<parallel>, #tpu.dimension_semantics<parallel>], iteration_bounds = array<i64: 2, 1>, scalar_prefetch = 0 : i64, scratch_operands = 0 : i64, tpu.core_type = #tpu.core_type<tc>, window_params = [{transform_indices = @transform_0, window_bounds = array<i64: 1, 16, 64>}, {pipeline_mode = #tpu.pipeline_mode<synchronous>, transform_indices = @transform_1, window_bounds = array<i64: 1, 64>}, {pipeline_mode = #tpu.pipeline_mode<synchronous>, transform_indices = @transform_2, window_bounds = array<i64: 1, 64>}, {pipeline_mode = #tpu.pipeline_mode<synchronous>, transform_indices = @transform_3, window_bounds = array<i64: 64, 64>}, {pipeline_mode = #tpu.pipeline_mode<synchronous>, transform_indices = @transform_4, window_bounds = array<i64: 64, 64>}, {pipeline_mode = #tpu.pipeline_mode<synchronous>, transform_indices = @transform_5, window_bounds = array<i64: 64, 64>}, {transform_indices = @transform_6, window_bounds = array<i64: 1, 4, 16, 16>}, {transform_indices = @transform_7, window_bounds = array<i64: 1, 4, 16, 16>}, {transform_indices = @transform_8, window_bounds = array<i64: 1, 4, 16, 16>}]} {
    %c0 = arith.constant 0 : index
    %c0_0 = arith.constant 0 : index
    %c0_1 = arith.constant 0 : index
    %0 = vector.load %arg2[%c0, %c0_0, %c0_1] : memref<1x16x64xf32, #tpu.memory_space<vmem>>, vector<1x16x64xf32>
    %1 = vector.shape_cast %0 : vector<1x16x64xf32> to vector<16x64xf32>
    %cst = arith.constant dense<0.000000e+00> : vector<16xf32>
    %2 = vector.multi_reduction <add>, %1, %cst [1] : vector<16x64xf32> to vector<16xf32>
    %3 = vector.shape_cast %2 : vector<16xf32> to vector<16x1xf32>
    %cst_2 = arith.constant 6.400000e+01 : f32
    %4 = vector.broadcast %cst_2 : f32 to vector<16x1xf32>
    %5 = arith.divf %3, %4 : vector<16x1xf32>
    %6 = vector.broadcast %5 : vector<16x1xf32> to vector<16x64xf32>
    %7 = arith.subf %1, %6 : vector<16x64xf32>
    %8 = arith.mulf %7, %7 : vector<16x64xf32>
    %cst_3 = arith.constant dense<0.000000e+00> : vector<16xf32>
    %9 = vector.multi_reduction <add>, %8, %cst_3 [1] : vector<16x64xf32> to vector<16xf32>
    %10 = vector.shape_cast %9 : vector<16xf32> to vector<16x1xf32>
    %cst_4 = arith.constant 6.400000e+01 : f32
    %11 = vector.broadcast %cst_4 : f32 to vector<16x1xf32>
    %12 = arith.divf %10, %11 : vector<16x1xf32>
    %13 = vector.broadcast %5 : vector<16x1xf32> to vector<16x64xf32>
    %14 = arith.subf %1, %13 : vector<16x64xf32>
    %cst_5 = arith.constant 9.99999997E-7 : f32
    %15 = vector.broadcast %cst_5 : f32 to vector<16x1xf32>
    %16 = arith.addf %12, %15 : vector<16x1xf32>
    %17 = math.rsqrt %16 : vector<16x1xf32>
    %18 = vector.broadcast %17 : vector<16x1xf32> to vector<16x64xf32>
    %19 = arith.mulf %14, %18 : vector<16x64xf32>
    %c0_6 = arith.constant 0 : index
    %c0_7 = arith.constant 0 : index
    %20 = vector.load %arg3[%c0_6, %c0_7] : memref<1x64xf32, #tpu.memory_space<vmem>>, vector<1x64xf32>
    %21 = vector.broadcast %20 : vector<1x64xf32> to vector<16x64xf32>
    %22 = arith.mulf %19, %21 : vector<16x64xf32>
    %c0_8 = arith.constant 0 : index
    %c0_9 = arith.constant 0 : index
    %23 = vector.load %arg4[%c0_8, %c0_9] : memref<1x64xf32, #tpu.memory_space<vmem>>, vector<1x64xf32>
    %24 = vector.broadcast %23 : vector<1x64xf32> to vector<16x64xf32>
    %25 = arith.addf %22, %24 : vector<16x64xf32>
    %26 = arith.truncf %25 : vector<16x64xf32> to vector<16x64xbf16>
    %c0_10 = arith.constant 0 : index
    %c0_11 = arith.constant 0 : index
    %27 = vector.load %arg5[%c0_10, %c0_11] : memref<64x64xbf16, #tpu.memory_space<vmem>>, vector<64x64xbf16>
    %cst_12 = arith.constant dense<0.000000e+00> : vector<16x64xf32>
    %28 = tpu.matmul %26, %27, %cst_12 {dimension_numbers = #tpu.dot_dimension_numbers<[1], [0], [0], [1], [0, 0, 1, 1], [], []>} : vector<16x64xbf16>, vector<64x64xbf16>, vector<16x64xf32> -> vector<16x64xf32>
    %c0_13 = arith.constant 0 : index
    %c0_14 = arith.constant 0 : index
    %29 = vector.load %arg6[%c0_13, %c0_14] : memref<64x64xbf16, #tpu.memory_space<vmem>>, vector<64x64xbf16>
    %cst_15 = arith.constant dense<0.000000e+00> : vector<16x64xf32>
    %30 = tpu.matmul %26, %29, %cst_15 {dimension_numbers = #tpu.dot_dimension_numbers<[1], [0], [0], [1], [0, 0, 1, 1], [], []>} : vector<16x64xbf16>, vector<64x64xbf16>, vector<16x64xf32> -> vector<16x64xf32>
    %c0_16 = arith.constant 0 : index
    %c0_17 = arith.constant 0 : index
    %31 = vector.load %arg7[%c0_16, %c0_17] : memref<64x64xbf16, #tpu.memory_space<vmem>>, vector<64x64xbf16>
    %cst_18 = arith.constant dense<0.000000e+00> : vector<16x64xf32>
    %32 = tpu.matmul %26, %31, %cst_18 {dimension_numbers = #tpu.dot_dimension_numbers<[1], [0], [0], [1], [0, 0, 1, 1], [], []>} : vector<16x64xbf16>, vector<64x64xbf16>, vector<16x64xf32> -> vector<16x64xf32>
    %33 = vector.extract_strided_slice %28 {offsets = [0, 0], sizes = [16, 16], strides = [1, 1]} : vector<16x64xf32> to vector<16x16xf32>
    %34 = arith.truncf %33 : vector<16x16xf32> to vector<16x16xbf16>
    %c0_19 = arith.constant 0 : index
    %c0_20 = arith.constant 0 : index
    %c0_21 = arith.constant 0 : index
    %c0_22 = arith.constant 0 : index
    %35 = vector.load %arg8[%c0_19, %c0_20, %c0_21, %c0_22] : memref<1x4x16x16xbf16, #tpu.memory_space<vmem>>, vector<1x1x16x16xbf16>
    %36 = vector.shape_cast %35 : vector<1x1x16x16xbf16> to vector<16x16xbf16>
    %37 = vector.shape_cast %34 : vector<16x16xbf16> to vector<1x1x16x16xbf16>
    tpu.vector_store %arg8[%c0_19, %c0_20, %c0_21, %c0_22], %37 {strides = array<i32>} : memref<1x4x16x16xbf16, #tpu.memory_space<vmem>>, vector<1x1x16x16xbf16>,
    %38 = vector.extract_strided_slice %30 {offsets = [0, 0], sizes = [16, 16], strides = [1, 1]} : vector<16x64xf32> to vector<16x16xf32>
    %39 = arith.truncf %38 : vector<16x16xf32> to vector<16x16xbf16>
    %c0_23 = arith.constant 0 : index
    %c0_24 = arith.constant 0 : index
    %c0_25 = arith.constant 0 : index
    %c0_26 = arith.constant 0 : index
    %40 = vector.load %arg9[%c0_23, %c0_24, %c0_25, %c0_26] : memref<1x4x16x16xbf16, #tpu.memory_space<vmem>>, vector<1x1x16x16xbf16>
    %41 = vector.shape_cast %40 : vector<1x1x16x16xbf16> to vector<16x16xbf16>
    %42 = vector.shape_cast %39 : vector<16x16xbf16> to vector<1x1x16x16xbf16>
    tpu.vector_store %arg9[%c0_23, %c0_24, %c0_25, %c0_26], %42 {strides = array<i32>} : memref<1x4x16x16xbf16, #tpu.memory_space<vmem>>, vector<1x1x16x16xbf16>,
    %43 = vector.extract_strided_slice %32 {offsets = [0, 0], sizes = [16, 16], strides = [1, 1]} : vector<16x64xf32> to vector<16x16xf32>
    %44 = arith.truncf %43 : vector<16x16xf32> to vector<16x16xbf16>
    %c0_27 = arith.constant 0 : index
    %c0_28 = arith.constant 0 : index
    %c0_29 = arith.constant 0 : index
    %c0_30 = arith.constant 0 : index
    %45 = vector.load %arg10[%c0_27, %c0_28, %c0_29, %c0_30] : memref<1x4x16x16xbf16, #tpu.memory_space<vmem>>, vector<1x1x16x16xbf16>
    %46 = vector.shape_cast %45 : vector<1x1x16x16xbf16> to vector<16x16xbf16>
    %47 = vector.shape_cast %44 : vector<16x16xbf16> to vector<1x1x16x16xbf16>
    tpu.vector_store %arg10[%c0_27, %c0_28, %c0_29, %c0_30], %47 {strides = array<i32>} : memref<1x4x16x16xbf16, #tpu.memory_space<vmem>>, vector<1x1x16x16xbf16>,
    %48 = vector.extract_strided_slice %28 {offsets = [0, 16], sizes = [16, 16], strides = [1, 1]} : vector<16x64xf32> to vector<16x16xf32>
    %49 = arith.truncf %48 : vector<16x16xf32> to vector<16x16xbf16>
    %c0_31 = arith.constant 0 : index
    %c1 = arith.constant 1 : index
    %c0_32 = arith.constant 0 : index
    %c0_33 = arith.constant 0 : index
    %50 = vector.load %arg8[%c0_31, %c1, %c0_32, %c0_33] : memref<1x4x16x16xbf16, #tpu.memory_space<vmem>>, vector<1x1x16x16xbf16>
    %51 = vector.shape_cast %50 : vector<1x1x16x16xbf16> to vector<16x16xbf16>
    %52 = vector.shape_cast %49 : vector<16x16xbf16> to vector<1x1x16x16xbf16>
    tpu.vector_store %arg8[%c0_31, %c1, %c0_32, %c0_33], %52 {strides = array<i32>} : memref<1x4x16x16xbf16, #tpu.memory_space<vmem>>, vector<1x1x16x16xbf16>,
    %53 = vector.extract_strided_slice %30 {offsets = [0, 16], sizes = [16, 16], strides = [1, 1]} : vector<16x64xf32> to vector<16x16xf32>
    %54 = arith.truncf %53 : vector<16x16xf32> to vector<16x16xbf16>
    %c0_34 = arith.constant 0 : index
    %c1_35 = arith.constant 1 : index
    %c0_36 = arith.constant 0 : index
    %c0_37 = arith.constant 0 : index
    %55 = vector.load %arg9[%c0_34, %c1_35, %c0_36, %c0_37] : memref<1x4x16x16xbf16, #tpu.memory_space<vmem>>, vector<1x1x16x16xbf16>
    %56 = vector.shape_cast %55 : vector<1x1x16x16xbf16> to vector<16x16xbf16>
    %57 = vector.shape_cast %54 : vector<16x16xbf16> to vector<1x1x16x16xbf16>
    tpu.vector_store %arg9[%c0_34, %c1_35, %c0_36, %c0_37], %57 {strides = array<i32>} : memref<1x4x16x16xbf16, #tpu.memory_space<vmem>>, vector<1x1x16x16xbf16>,
    %58 = vector.extract_strided_slice %32 {offsets = [0, 16], sizes = [16, 16], strides = [1, 1]} : vector<16x64xf32> to vector<16x16xf32>
    %59 = arith.truncf %58 : vector<16x16xf32> to vector<16x16xbf16>
    %c0_38 = arith.constant 0 : index
    %c1_39 = arith.constant 1 : index
    %c0_40 = arith.constant 0 : index
    %c0_41 = arith.constant 0 : index
    %60 = vector.load %arg10[%c0_38, %c1_39, %c0_40, %c0_41] : memref<1x4x16x16xbf16, #tpu.memory_space<vmem>>, vector<1x1x16x16xbf16>
    %61 = vector.shape_cast %60 : vector<1x1x16x16xbf16> to vector<16x16xbf16>
    %62 = vector.shape_cast %59 : vector<16x16xbf16> to vector<1x1x16x16xbf16>
    tpu.vector_store %arg10[%c0_38, %c1_39, %c0_40, %c0_41], %62 {strides = array<i32>} : memref<1x4x16x16xbf16, #tpu.memory_space<vmem>>, vector<1x1x16x16xbf16>,
    %63 = vector.extract_strided_slice %28 {offsets = [0, 32], sizes = [16, 16], strides = [1, 1]} : vector<16x64xf32> to vector<16x16xf32>
    %64 = arith.truncf %63 : vector<16x16xf32> to vector<16x16xbf16>
    %c0_42 = arith.constant 0 : index
    %c2 = arith.constant 2 : index
    %c0_43 = arith.constant 0 : index
    %c0_44 = arith.constant 0 : index
    %65 = vector.load %arg8[%c0_42, %c2, %c0_43, %c0_44] : memref<1x4x16x16xbf16, #tpu.memory_space<vmem>>, vector<1x1x16x16xbf16>
    %66 = vector.shape_cast %65 : vector<1x1x16x16xbf16> to vector<16x16xbf16>
    %67 = vector.shape_cast %64 : vector<16x16xbf16> to vector<1x1x16x16xbf16>
    tpu.vector_store %arg8[%c0_42, %c2, %c0_43, %c0_44], %67 {strides = array<i32>} : memref<1x4x16x16xbf16, #tpu.memory_space<vmem>>, vector<1x1x16x16xbf16>,
    %68 = vector.extract_strided_slice %30 {offsets = [0, 32], sizes = [16, 16], strides = [1, 1]} : vector<16x64xf32> to vector<16x16xf32>
    %69 = arith.truncf %68 : vector<16x16xf32> to vector<16x16xbf16>
    %c0_45 = arith.constant 0 : index
    %c2_46 = arith.constant 2 : index
    %c0_47 = arith.constant 0 : index
    %c0_48 = arith.constant 0 : index
    %70 = vector.load %arg9[%c0_45, %c2_46, %c0_47, %c0_48] : memref<1x4x16x16xbf16, #tpu.memory_space<vmem>>, vector<1x1x16x16xbf16>
    %71 = vector.shape_cast %70 : vector<1x1x16x16xbf16> to vector<16x16xbf16>
    %72 = vector.shape_cast %69 : vector<16x16xbf16> to vector<1x1x16x16xbf16>
    tpu.vector_store %arg9[%c0_45, %c2_46, %c0_47, %c0_48], %72 {strides = array<i32>} : memref<1x4x16x16xbf16, #tpu.memory_space<vmem>>, vector<1x1x16x16xbf16>,
    %73 = vector.extract_strided_slice %32 {offsets = [0, 32], sizes = [16, 16], strides = [1, 1]} : vector<16x64xf32> to vector<16x16xf32>
    %74 = arith.truncf %73 : vector<16x16xf32> to vector<16x16xbf16>
    %c0_49 = arith.constant 0 : index
    %c2_50 = arith.constant 2 : index
    %c0_51 = arith.constant 0 : index
    %c0_52 = arith.constant 0 : index
    %75 = vector.load %arg10[%c0_49, %c2_50, %c0_51, %c0_52] : memref<1x4x16x16xbf16, #tpu.memory_space<vmem>>, vector<1x1x16x16xbf16>
    %76 = vector.shape_cast %75 : vector<1x1x16x16xbf16> to vector<16x16xbf16>
    %77 = vector.shape_cast %74 : vector<16x16xbf16> to vector<1x1x16x16xbf16>
    tpu.vector_store %arg10[%c0_49, %c2_50, %c0_51, %c0_52], %77 {strides = array<i32>} : memref<1x4x16x16xbf16, #tpu.memory_space<vmem>>, vector<1x1x16x16xbf16>,
    %78 = vector.extract_strided_slice %28 {offsets = [0, 48], sizes = [16, 16], strides = [1, 1]} : vector<16x64xf32> to vector<16x16xf32>
    %79 = arith.truncf %78 : vector<16x16xf32> to vector<16x16xbf16>
    %c0_53 = arith.constant 0 : index
    %c3 = arith.constant 3 : index
    %c0_54 = arith.constant 0 : index
    %c0_55 = arith.constant 0 : index
    %80 = vector.load %arg8[%c0_53, %c3, %c0_54, %c0_55] : memref<1x4x16x16xbf16, #tpu.memory_space<vmem>>, vector<1x1x16x16xbf16>
    %81 = vector.shape_cast %80 : vector<1x1x16x16xbf16> to vector<16x16xbf16>
    %82 = vector.shape_cast %79 : vector<16x16xbf16> to vector<1x1x16x16xbf16>
    tpu.vector_store %arg8[%c0_53, %c3, %c0_54, %c0_55], %82 {strides = array<i32>} : memref<1x4x16x16xbf16, #tpu.memory_space<vmem>>, vector<1x1x16x16xbf16>,
    %83 = vector.extract_strided_slice %30 {offsets = [0, 48], sizes = [16, 16], strides = [1, 1]} : vector<16x64xf32> to vector<16x16xf32>
    %84 = arith.truncf %83 : vector<16x16xf32> to vector<16x16xbf16>
    %c0_56 = arith.constant 0 : index
    %c3_57 = arith.constant 3 : index
    %c0_58 = arith.constant 0 : index
    %c0_59 = arith.constant 0 : index
    %85 = vector.load %arg9[%c0_56, %c3_57, %c0_58, %c0_59] : memref<1x4x16x16xbf16, #tpu.memory_space<vmem>>, vector<1x1x16x16xbf16>
    %86 = vector.shape_cast %85 : vector<1x1x16x16xbf16> to vector<16x16xbf16>
    %87 = vector.shape_cast %84 : vector<16x16xbf16> to vector<1x1x16x16xbf16>
    tpu.vector_store %arg9[%c0_56, %c3_57, %c0_58, %c0_59], %87 {strides = array<i32>} : memref<1x4x16x16xbf16, #tpu.memory_space<vmem>>, vector<1x1x16x16xbf16>,
    %88 = vector.extract_strided_slice %32 {offsets = [0, 48], sizes = [16, 16], strides = [1, 1]} : vector<16x64xf32> to vector<16x16xf32>
    %89 = arith.truncf %88 : vector<16x16xf32> to vector<16x16xbf16>
    %c0_60 = arith.constant 0 : index
    %c3_61 = arith.constant 3 : index
    %c0_62 = arith.constant 0 : index
    %c0_63 = arith.constant 0 : index
    %90 = vector.load %arg10[%c0_60, %c3_61, %c0_62, %c0_63] : memref<1x4x16x16xbf16, #tpu.memory_space<vmem>>, vector<1x1x16x16xbf16>
    %91 = vector.shape_cast %90 : vector<1x1x16x16xbf16> to vector<16x16xbf16>
    %92 = vector.shape_cast %89 : vector<16x16xbf16> to vector<1x1x16x16xbf16>
    tpu.vector_store %arg10[%c0_60, %c3_61, %c0_62, %c0_63], %92 {strides = array<i32>} : memref<1x4x16x16xbf16, #tpu.memory_space<vmem>>, vector<1x1x16x16xbf16>,
    return
  }
  func.func @transform_0(%arg0: i32, %arg1: i32) -> (i32, i32, i32) {
    %c0_i32 = arith.constant 0 : i32
    %c0_i32_0 = arith.constant 0 : i32
    return %arg0, %arg1, %c0_i32 : i32, i32, i32
  }
  func.func @transform_1(%arg0: i32, %arg1: i32) -> (i32, i32) {
    %c0_i32 = arith.constant 0 : i32
    %c0_i32_0 = arith.constant 0 : i32
    %c0_i32_1 = arith.constant 0 : i32
    return %c0_i32, %c0_i32_0 : i32, i32
  }
  func.func @transform_2(%arg0: i32, %arg1: i32) -> (i32, i32) {
    %c0_i32 = arith.constant 0 : i32
    %c0_i32_0 = arith.constant 0 : i32
    %c0_i32_1 = arith.constant 0 : i32
    return %c0_i32, %c0_i32_0 : i32, i32
  }
  func.func @transform_3(%arg0: i32, %arg1: i32) -> (i32, i32) {
    %c0_i32 = arith.constant 0 : i32
    %c0_i32_0 = arith.constant 0 : i32
    %c0_i32_1 = arith.constant 0 : i32
    return %c0_i32, %c0_i32_0 : i32, i32
  }
  func.func @transform_4(%arg0: i32, %arg1: i32) -> (i32, i32) {
    %c0_i32 = arith.constant 0 : i32
    %c0_i32_0 = arith.constant 0 : i32
    %c0_i32_1 = arith.constant 0 : i32
    return %c0_i32, %c0_i32_0 : i32, i32
  }
  func.func @transform_5(%arg0: i32, %arg1: i32) -> (i32, i32) {
    %c0_i32 = arith.constant 0 : i32
    %c0_i32_0 = arith.constant 0 : i32
    %c0_i32_1 = arith.constant 0 : i32
    return %c0_i32, %c0_i32_0 : i32, i32
  }
  func.func @transform_6(%arg0: i32, %arg1: i32) -> (i32, i32, i32, i32) {
    %c0_i32 = arith.constant 0 : i32
    %c0_i32_0 = arith.constant 0 : i32
    %c0_i32_1 = arith.constant 0 : i32
    return %arg0, %c0_i32, %arg1, %c0_i32_0 : i32, i32, i32, i32
  }
  func.func @transform_7(%arg0: i32, %arg1: i32) -> (i32, i32, i32, i32) {
    %c0_i32 = arith.constant 0 : i32
    %c0_i32_0 = arith.constant 0 : i32
    %c0_i32_1 = arith.constant 0 : i32
    return %arg0, %c0_i32, %arg1, %c0_i32_0 : i32, i32, i32, i32
  }
  func.func @transform_8(%arg0: i32, %arg1: i32) -> (i32, i32, i32, i32) {
    %c0_i32 = arith.constant 0 : i32
    %c0_i32_0 = arith.constant 0 : i32
    %c0_i32_1 = arith.constant 0 : i32
    return %arg0, %c0_i32, %arg1, %c0_i32_0 : i32, i32, i32, i32
  }
}

</mosaic_0001>

<llo_original>
// kernel: tpu_custom_call.1
$region0: #{tpu_custom_call.1}
  #allocation0 [shape = 'u32[]', space=smem, size = 0x4, offset = 0x4, fixed_abs, tag = 'smem constant byte address 0x4 - core index']
  #allocation1 [shape = 'u32[144,128]{1,0:T(1,128)}', space=vmem, size = 0x12000, scoped, tag = 'internal scratch']
  %s0 = inlined_call_operand.hbm [shape: f32[2,16,64], index: 0, kind: input, shape index: {}]
  %s1 = inlined_call_operand.vmem [shape: f32[1,64], index: 1, kind: input, shape index: {}]
  %s2 = inlined_call_operand.vmem [shape: f32[1,64], index: 2, kind: input, shape index: {}]
  %s3 = inlined_call_operand.hbm [shape: bf16[64,64], index: 3, kind: input, shape index: {}]
  %s4 = inlined_call_operand.hbm [shape: bf16[64,64], index: 4, kind: input, shape index: {}]
  %s5 = inlined_call_operand.hbm [shape: bf16[64,64], index: 5, kind: input, shape index: {}]
  %s6 = inlined_call_operand.hbm [shape: bf16[2,4,16,16], index: 6, kind: output, shape index: {0}]
  %s7 = inlined_call_operand.hbm [shape: bf16[2,4,16,16], index: 7, kind: output, shape index: {1}]
  %s8 = inlined_call_operand.hbm [shape: bf16[2,4,16,16], index: 8, kind: output, shape index: {2}]
  %9 = xla_tuple %s6, %s7, %s8
  %s10 = sld [smem:[#allocation0]]
  $region89: #{tpu_custom_call.1} parent=0
    _
  %s12 = ssub.s32 1, %s10
  %s13 = scalar_select 0, %s12, %s10
  $region1: #{tpu_custom_call.1} parent=0
    #allocation2 [shape = 'u8[16384]{0}', space=vmem, size = 0x4000, scoped, tag = 'input window, operand 0']
    #allocation3 [shape = 's32[2]{0}', space=sflag, size = 0x8, scoped, tag = 'scoped memory for tpu_custom_call.1']
    #allocation4 [shape = 's32[2]{0}', space=sflag, size = 0x8, scoped, tag = 'scoped memory for tpu_custom_call.1']
    #allocation5 [shape = 'u8[16384]{0}', space=vmem, size = 0x4000, scoped, tag = 'input window, operand 3, single buffered']
    #allocation6 [shape = 's32[1]{0}', space=sflag, size = 0x4, scoped, tag = 'scoped memory for tpu_custom_call.1']
    #allocation7 [shape = 'u8[16384]{0}', space=vmem, size = 0x4000, scoped, tag = 'input window, operand 4, single buffered']
    #allocation8 [shape = 'u8[16384]{0}', space=vmem, size = 0x4000, scoped, tag = 'input window, operand 5, single buffered']
    #allocation9 [shape = 's32[1]{0}', space=sflag, size = 0x4, scoped, tag = 'scoped memory for tpu_custom_call.1']
    #allocation10 [shape = 'u8[32768]{0}', space=vmem, size = 0x8000, scoped, tag = 'output window, operand 0']
    #allocation11 [shape = 'u8[32768]{0}', space=vmem, size = 0x8000, scoped, tag = 'output window, operand 1']
    #allocation12 [shape = 's32[2]{0}', space=sflag, size = 0x8, scoped, tag = 'scoped memory for tpu_custom_call.1']
    #allocation13 [shape = 'u8[32768]{0}', space=vmem, size = 0x8000, scoped, tag = 'output window, operand 2']
    %14 = vsyncpa [#allocation3], 0
    %s15 = scalar_lea.sflag [#allocation3], 1
    %16 = vsyncpa %s15, 0
    %17 = vsyncpa [#allocation6], 0
    %18 = vsyncpa [#allocation9], 0
    %19 = vsyncpa [#allocation4], 0
    %s20 = scalar_lea.sflag [#allocation4], 1
    %21 = vsyncpa %s20, 0
    %22 = vsyncpa [#allocation12], 0
    %s23 = scalar_lea.sflag [#allocation12], 1
    %24 = vsyncpa %s23, 0
    loop: start=0, step=1, limit=4
    $region2: #{tpu_custom_call.1} parent=1 // loop_pre_header
      _
    $region3: #{tpu_custom_call.1} parent=1 // loop_header
      %s26 = sphi 0, %s30
      %p27 = scmp.ge.s32.totalorder %s26, 4
      %s33 = sphi 0, %s45
      %s34 = sphi 0, %s41
      %s35 = sphi 0, %s33
      %s36 = sphi 0, %s34
      %s37 = sphi 0, %s35
      %s38 = sphi 0, %s36
      %s50 = sphi 0, %s52
      %s53 = sphi 0, %s50
      %s54 = sphi 0, %s53
      %s70 = sphi 0, %s54
      %s74 = sphi 0, %s74
      %s76 = sphi 0, %s74
      %s77 = sphi 0, %s76
      %s91 = sphi 0, %s77
      %s95 = sphi 0, %s95
      %s97 = sphi 0, %s95
      %s98 = sphi 0, %s97
      %s112 = sphi 0, %s98
      %s116 = sphi 0, %s116
      %s118 = sphi 0, %s116
      %s119 = sphi 0, %s118
      %s133 = sphi 0, %s119
      %s137 = sphi 0, %s137
      %s139 = sphi 0, %s137
      %s140 = sphi 0, %s139
      %s154 = sphi 0, %s140
      %s158 = sphi 0, %s158
      %s160 = sphi 0, %s158
      %s161 = sphi 0, %s160
      %s175 = sphi 0, %s161
      %s183 = sphi 0, %s185
      %s186 = sphi 0, %s183
      %s187 = sphi 0, %s186
      %s203 = sphi 0, %s187
      %s211 = sphi 0, %s213
      %s214 = sphi 0, %s211
      %s215 = sphi 0, %s214
      %s231 = sphi 0, %s215
      %s239 = sphi 0, %s241
      %s242 = sphi 0, %s239
      %s243 = sphi 0, %s242
      %s259 = sphi 0, %s243
    $region4: #{tpu_custom_call.1} parent=1 // loop_header_branch
      %29 = sbr.rel (%p27) target = $region8
    $region5: #{tpu_custom_call.1} parent=1 // loop_body
      %s31 = ssub.s32 %s26, 1
      %s32 = ssub.s32 %s26, 2
      %s39 = sadd.s32 1, %s34
      %p40 = scmp.ge.s32.totalorder %s39, 1
      %s41 = scalar_select %p40, 0, %s39
      %s42 = sadd.s32 1, %s33
      %s43 = scalar_select %p40, %s42, %s33
      %p44 = scmp.ge.s32.totalorder %s43, 2
      %s45 = scalar_select %p44, 0, %s43
      %s46 = ssub.s32 %s33, %s45
      %s47 = ssub.s32 %s34, %s41
      %s48 = sor.u32 %s46, %s47
      %p49 = scmp.eq.s32.totalorder %s48, 0
      %s51 = sadd.s32 %s50, 1
      %s52 = scalar_select %p49, %s50, %s51
      %p55 = pneg %p49
      %p56 = scmp.eq.s32.totalorder %s26, 1
      %p57 = por %p55, %p56
      %p58 = scmp.ne.s32.totalorder %s50, %s53
      %p59 = scmp.eq.s32.totalorder %s26, 0
      %p60 = por %p58, %p59
      %p61 = scmp.ne.s32.totalorder %s50, %s53
      %p62 = scmp.eq.s32.totalorder %s31, 1
      %p63 = por %p61, %p62
      %p64 = scmp.ne.s32.totalorder %s53, %s54
      %p65 = scmp.eq.s32.totalorder %s31, 0
      %p66 = por %p64, %p65
      %p67 = scmp.ne.s32.totalorder %s53, %s54
      %p68 = scmp.eq.s32.totalorder %s32, 1
      %p69 = por %p67, %p68
      %p71 = scmp.ne.s32.totalorder %s54, %s70
      %p72 = scmp.eq.s32.totalorder %s32, 0
      %p73 = por %p71, %p72
      %s75 = sadd.s32 %s74, 1
      %p78 = scmp.eq.s32.totalorder %s26, 1
      %p79 = scmp.ne.s32.totalorder %s74, %s76
      %p80 = scmp.eq.s32.totalorder %s26, 0
      %p81 = por %p79, %p80
      %p82 = scmp.ne.s32.totalorder %s74, %s76
      %p83 = scmp.eq.s32.totalorder %s31, 1
      %p84 = por %p82, %p83
      %p85 = scmp.ne.s32.totalorder %s76, %s77
      %p86 = scmp.eq.s32.totalorder %s31, 0
      %p87 = por %p85, %p86
      %p88 = scmp.ne.s32.totalorder %s76, %s77
      %p89 = scmp.eq.s32.totalorder %s32, 1
      %p90 = por %p88, %p89
      %p92 = scmp.ne.s32.totalorder %s77, %s91
      %p93 = scmp.eq.s32.totalorder %s32, 0
      %p94 = por %p92, %p93
      %s96 = sadd.s32 %s95, 1
      %p99 = scmp.eq.s32.totalorder %s26, 1
      %p100 = scmp.ne.s32.totalorder %s95, %s97
      %p101 = scmp.eq.s32.totalorder %s26, 0
      %p102 = por %p100, %p101
      %p103 = scmp.ne.s32.totalorder %s95, %s97
      %p104 = scmp.eq.s32.totalorder %s31, 1
      %p105 = por %p103, %p104
      %p106 = scmp.ne.s32.totalorder %s97, %s98
      %p107 = scmp.eq.s32.totalorder %s31, 0
      %p108 = por %p106, %p107
      %p109 = scmp.ne.s32.totalorder %s97, %s98
      %p110 = scmp.eq.s32.totalorder %s32, 1
      %p111 = por %p109, %p110
      %p113 = scmp.ne.s32.totalorder %s98, %s112
      %p114 = scmp.eq.s32.totalorder %s32, 0
      %p115 = por %p113, %p114
      %s117 = sadd.s32 %s116, 1
      %p120 = scmp.eq.s32.totalorder %s26, 1
      %p121 = scmp.ne.s32.totalorder %s116, %s118
      %p122 = scmp.eq.s32.totalorder %s26, 0
      %p123 = por %p121, %p122
      %p124 = scmp.ne.s32.totalorder %s116, %s118
      %p125 = scmp.eq.s32.totalorder %s31, 1
      %p126 = por %p124, %p125
      %p127 = scmp.ne.s32.totalorder %s118, %s119
      %p128 = scmp.eq.s32.totalorder %s31, 0
      %p129 = por %p127, %p128
      %p130 = scmp.ne.s32.totalorder %s118, %s119
      %p131 = scmp.eq.s32.totalorder %s32, 1
      %p132 = por %p130, %p131
      %p134 = scmp.ne.s32.totalorder %s119, %s133
      %p135 = scmp.eq.s32.totalorder %s32, 0
      %p136 = por %p134, %p135
      %s138 = sadd.s32 %s137, 1
      %p141 = scmp.eq.s32.totalorder %s26, 1
      %p142 = scmp.ne.s32.totalorder %s137, %s139
      %p143 = scmp.eq.s32.totalorder %s26, 0
      %p144 = por %p142, %p143
      %p145 = scmp.ne.s32.totalorder %s137, %s139
      %p146 = scmp.eq.s32.totalorder %s31, 1
      %p147 = por %p145, %p146
      %p148 = scmp.ne.s32.totalorder %s139, %s140
      %p149 = scmp.eq.s32.totalorder %s31, 0
      %p150 = por %p148, %p149
      %p151 = scmp.ne.s32.totalorder %s139, %s140
      %p152 = scmp.eq.s32.totalorder %s32, 1
      %p153 = por %p151, %p152
      %p155 = scmp.ne.s32.totalorder %s140, %s154
      %p156 = scmp.eq.s32.totalorder %s32, 0
      %p157 = por %p155, %p156
      %s159 = sadd.s32 %s158, 1
      %p162 = scmp.eq.s32.totalorder %s26, 1
      %p163 = scmp.ne.s32.totalorder %s158, %s160
      %p164 = scmp.eq.s32.totalorder %s26, 0
      %p165 = por %p163, %p164
      %p166 = scmp.ne.s32.totalorder %s158, %s160
      %p167 = scmp.eq.s32.totalorder %s31, 1
      %p168 = por %p166, %p167
      %p169 = scmp.ne.s32.totalorder %s160, %s161
      %p170 = scmp.eq.s32.totalorder %s31, 0
      %p171 = por %p169, %p170
      %p172 = scmp.ne.s32.totalorder %s160, %s161
      %p173 = scmp.eq.s32.totalorder %s32, 1
      %p174 = por %p172, %p173
      %p176 = scmp.ne.s32.totalorder %s161, %s175
      %p177 = scmp.eq.s32.totalorder %s32, 0
      %p178 = por %p176, %p177
      %s179 = ssub.s32 %s33, %s45
      %s180 = ssub.s32 %s34, %s41
      %s181 = sor.u32 %s179, %s180
      %p182 = scmp.eq.s32.totalorder %s181, 0
      %s184 = sadd.s32 %s183, 1
      %s185 = scalar_select %p182, %s183, %s184
      %p188 = pneg %p182
      %p189 = scmp.eq.s32.totalorder %s26, 1
      %p190 = por %p188, %p189
      %p191 = scmp.ne.s32.totalorder %s183, %s186
      %p192 = scmp.eq.s32.totalorder %s26, 0
      %p193 = por %p191, %p192
      %p194 = scmp.ne.s32.totalorder %s183, %s186
      %p195 = scmp.eq.s32.totalorder %s31, 1
      %p196 = por %p194, %p195
      %p197 = scmp.ne.s32.totalorder %s186, %s187
      %p198 = scmp.eq.s32.totalorder %s31, 0
      %p199 = por %p197, %p198
      %p200 = scmp.ne.s32.totalorder %s186, %s187
      %p201 = scmp.eq.s32.totalorder %s32, 1
      %p202 = por %p200, %p201
      %p204 = scmp.ne.s32.totalorder %s187, %s203
      %p205 = scmp.eq.s32.totalorder %s32, 0
      %p206 = por %p204, %p205
      %s207 = ssub.s32 %s33, %s45
      %s208 = ssub.s32 %s34, %s41
      %s209 = sor.u32 %s207, %s208
      %p210 = scmp.eq.s32.totalorder %s209, 0
      %s212 = sadd.s32 %s211, 1
      %s213 = scalar_select %p210, %s211, %s212
      %p216 = pneg %p210
      %p217 = scmp.eq.s32.totalorder %s26, 1
      %p218 = por %p216, %p217
      %p219 = scmp.ne.s32.totalorder %s211, %s214
      %p220 = scmp.eq.s32.totalorder %s26, 0
      %p221 = por %p219, %p220
      %p222 = scmp.ne.s32.totalorder %s211, %s214
      %p223 = scmp.eq.s32.totalorder %s31, 1
      %p224 = por %p222, %p223
      %p225 = scmp.ne.s32.totalorder %s214, %s215
      %p226 = scmp.eq.s32.totalorder %s31, 0
      %p227 = por %p225, %p226
      %p228 = scmp.ne.s32.totalorder %s214, %s215
      %p229 = scmp.eq.s32.totalorder %s32, 1
      %p230 = por %p228, %p229
      %p232 = scmp.ne.s32.totalorder %s215, %s231
      %p233 = scmp.eq.s32.totalorder %s32, 0
      %p234 = por %p232, %p233
      %s235 = ssub.s32 %s33, %s45
      %s236 = ssub.s32 %s34, %s41
      %s237 = sor.u32 %s235, %s236
      %p238 = scmp.eq.s32.totalorder %s237, 0
      %s240 = sadd.s32 %s239, 1
      %s241 = scalar_select %p238, %s239, %s240
      %p244 = pneg %p238
      %p245 = scmp.eq.s32.totalorder %s26, 1
      %p246 = por %p244, %p245
      %p247 = scmp.ne.s32.totalorder %s239, %s242
      %p248 = scmp.eq.s32.totalorder %s26, 0
      %p249 = por %p247, %p248
      %p250 = scmp.ne.s32.totalorder %s239, %s242
      %p251 = scmp.eq.s32.totalorder %s31, 1
      %p252 = por %p250, %p251
      %p253 = scmp.ne.s32.totalorder %s242, %s243
      %p254 = scmp.eq.s32.totalorder %s31, 0
      %p255 = por %p253, %p254
      %p256 = scmp.ne.s32.totalorder %s242, %s243
      %p257 = scmp.eq.s32.totalorder %s32, 1
      %p258 = por %p256, %p257
      %p260 = scmp.ne.s32.totalorder %s243, %s259
      %p261 = scmp.eq.s32.totalorder %s32, 0
      %p262 = por %p260, %p261
      %p263 = scmp.le.s32.totalorder 1, %s26
      %p264 = scmp.lt.s32.totalorder %s26, 3
      %p265 = pnand %p263, %p264
      %p266 = pneg %p265
      // Predicated region
      $region9: #{tpu_custom_call.1} parent=5 // pred_check
        _
      $region10: #{tpu_custom_call.1} parent=5 // pred_check_branch
        %268 = sbr.rel (%p265) target = $region12
      $region11: #{tpu_custom_call.1} parent=5 // pred_region
        %s269 = ssub.s32 %s26, 1
        // Predicated region
        $region13: #{tpu_custom_call.1} parent=11 // pred_check
          %p270 = pneg %p87
        $region14: #{tpu_custom_call.1} parent=11 // pred_check_branch
          %272 = sbr.rel (%p270) target = $region16
        $region15: #{tpu_custom_call.1} parent=11 // pred_region
          _
        $region16: #{tpu_custom_call.1} parent=11 // pred_fallthru
          _
        // Predicated region
        $region17: #{tpu_custom_call.1} parent=11 // pred_check
          %p273 = pneg %p108
        $region18: #{tpu_custom_call.1} parent=11 // pred_check_branch
          %275 = sbr.rel (%p273) target = $region20
        $region19: #{tpu_custom_call.1} parent=11 // pred_region
          _
        $region20: #{tpu_custom_call.1} parent=11 // pred_fallthru
          _
        // Predicated region
        $region21: #{tpu_custom_call.1} parent=11 // pred_check
          %p276 = pneg %p129
        $region22: #{tpu_custom_call.1} parent=11 // pred_check_branch
          %278 = sbr.rel (%p276) target = $region24
        $region23: #{tpu_custom_call.1} parent=11 // pred_region
          %s280 = ssub.s32 512, 512
          %281 = vsyncadd [#allocation6], %s280
          %s282 = sshll.u32 [#allocation5], 4
          %s283 = int_to_ptr.vmem [resolvable:$true] %s282
          %288 = dma.hbm_to_vmem [thread:$0]  %s3, 512, %s283, [#allocation6], 64, 64, 4
        $region24: #{tpu_custom_call.1} parent=11 // pred_fallthru
          _
        // Predicated region
        $region25: #{tpu_custom_call.1} parent=11 // pred_check
          %p289 = pneg %p150
        $region26: #{tpu_custom_call.1} parent=11 // pred_check_branch
          %291 = sbr.rel (%p289) target = $region28
        $region27: #{tpu_custom_call.1} parent=11 // pred_region
          %s293 = ssub.s32 512, 512
          %294 = vsyncadd [#allocation6], %s293
          %s295 = sshll.u32 [#allocation7], 4
          %s296 = int_to_ptr.vmem [resolvable:$true] %s295
          %301 = dma.hbm_to_vmem [thread:$0]  %s4, 512, %s296, [#allocation6], 64, 64, 4
        $region28: #{tpu_custom_call.1} parent=11 // pred_fallthru
          _
        // Predicated region
        $region29: #{tpu_custom_call.1} parent=11 // pred_check
          %p302 = pneg %p171
        $region30: #{tpu_custom_call.1} parent=11 // pred_check_branch
          %304 = sbr.rel (%p302) target = $region32
        $region31: #{tpu_custom_call.1} parent=11 // pred_region
          %s306 = ssub.s32 512, 512
          %307 = vsyncadd [#allocation9], %s306
          %s308 = sshll.u32 [#allocation8], 4
          %s309 = int_to_ptr.vmem [resolvable:$true] %s308
          %314 = dma.hbm_to_vmem [thread:$0]  %s5, 512, %s309, [#allocation9], 64, 64, 4
        $region32: #{tpu_custom_call.1} parent=11 // pred_fallthru
          _
      $region12: #{tpu_custom_call.1} parent=5 // pred_fallthru
        _
      %p315 = scmp.lt.s32.totalorder %s26, 2
      // Predicated region
      $region33: #{tpu_custom_call.1} parent=5 // pred_check
        %p316 = pneg %p315
      $region34: #{tpu_custom_call.1} parent=5 // pred_check_branch
        %318 = sbr.rel (%p316) target = $region36
      $region35: #{tpu_custom_call.1} parent=5 // pred_region
        // Predicated region
        $region37: #{tpu_custom_call.1} parent=35 // pred_check
          %p319 = pneg %p60
        $region38: #{tpu_custom_call.1} parent=35 // pred_check_branch
          %321 = sbr.rel (%p319) target = $region40
        $region39: #{tpu_custom_call.1} parent=35 // pred_region
          %s322 = sand.u32 %s50, 1
          %s323 = scalar_lea.sflag [#allocation3], %s322
          %s324 = sand.u32 %s50, 1
          %s325 = smul.addr %s324, 16
          %s326 = scalar_lea.vmem [#allocation2], %s325
          %s327 = smul.u32 2, %s34
          %s329 = ssub.s32 256, 256
          %330 = vsyncadd %s323, %s329
          %s331 = smul.addr %s33, 2
          %s332 = sadd.s32 %s327, %s331
          %s333 = smul.addr %s332, 128
          %s334 = scalar_lea.hbm %s0, %s333
          %s335 = sshll.u32 %s326, 4
          %s336 = int_to_ptr.vmem [resolvable:$true] %s335
          %341 = dma.hbm_to_vmem [thread:$0]  %s334, 256, %s336, %s323, 128, 128, 8
        $region40: #{tpu_custom_call.1} parent=35 // pred_fallthru
          _
      $region36: #{tpu_custom_call.1} parent=5 // pred_fallthru
        _
      %p342 = scmp.le.s32.totalorder 1, %s26
      %p343 = scmp.lt.s32.totalorder %s26, 3
      %p344 = pnand %p342, %p343
      %p345 = pneg %p344
      // Predicated region
      $region41: #{tpu_custom_call.1} parent=5 // pred_check
        _
      $region42: #{tpu_custom_call.1} parent=5 // pred_check_branch
        %347 = sbr.rel (%p344) target = $region44
      $region43: #{tpu_custom_call.1} parent=5 // pred_region
        %s348 = ssub.s32 %s26, 1
        %s349 = sand.u32 %s53, 1
        %s350 = scalar_lea.sflag [#allocation3], %s349
        %s351 = sand.u32 %s53, 1
        %s352 = smul.addr %s351, 16
        %s353 = scalar_lea.vmem [#allocation2], %s352
        // Predicated region
        $region45: #{tpu_custom_call.1} parent=43 // pred_check
          %p354 = pneg %p66
        $region46: #{tpu_custom_call.1} parent=43 // pred_check_branch
          %356 = sbr.rel (%p354) target = $region48
        $region47: #{tpu_custom_call.1} parent=43 // pred_region
          %357 = dma.done %s350, 256
        $region48: #{tpu_custom_call.1} parent=43 // pred_fallthru
          _
        // Predicated region
        $region49: #{tpu_custom_call.1} parent=43 // pred_check
          %p358 = pneg %p129
        $region50: #{tpu_custom_call.1} parent=43 // pred_check_branch
          %360 = sbr.rel (%p358) target = $region52
        $region51: #{tpu_custom_call.1} parent=43 // pred_region
          %361 = dma.done [#allocation6], 512
        $region52: #{tpu_custom_call.1} parent=43 // pred_fallthru
          _
        // Predicated region
        $region53: #{tpu_custom_call.1} parent=43 // pred_check
          %p362 = pneg %p150
        $region54: #{tpu_custom_call.1} parent=43 // pred_check_branch
          %364 = sbr.rel (%p362) target = $region56
        $region55: #{tpu_custom_call.1} parent=43 // pred_region
          %365 = dma.done [#allocation6], 512
        $region56: #{tpu_custom_call.1} parent=43 // pred_fallthru
          _
        // Predicated region
        $region57: #{tpu_custom_call.1} parent=43 // pred_check
          %p366 = pneg %p171
        $region58: #{tpu_custom_call.1} parent=43 // pred_check_branch
          %368 = sbr.rel (%p366) target = $region60
        $region59: #{tpu_custom_call.1} parent=43 // pred_region
          %369 = dma.done [#allocation9], 512
        $region60: #{tpu_custom_call.1} parent=43 // pred_fallthru
          _
        %s370 = sand.u32 %s53, 1
        %s371 = scalar_lea.sflag [#allocation3], %s370
        %s372 = sand.u32 %s53, 1
        %s373 = smul.addr %s372, 16
        %s374 = scalar_lea.vmem [#allocation2], %s373
        %p375 = pneg %p66
        %p376 = pneg %p63
        %p377 = pneg %p87
        %p378 = pneg %p84
        %p379 = pneg %p108
        %p380 = pneg %p105
        %p381 = pneg %p129
        %p382 = pneg %p126
        %p383 = pneg %p150
        %p384 = pneg %p147
        %p385 = pneg %p171
        %p386 = pneg %p168
        %p387 = pneg %p199
        %p388 = pneg %p196
        %s389 = sand.u32 %s186, 1
        %s390 = scalar_lea.sflag [#allocation4], %s389
        %s391 = sand.u32 %s186, 1
        %s392 = smul.addr %s391, 32
        %s393 = scalar_lea.vmem [#allocation10], %s392
        %p394 = pneg %p227
        %p395 = pneg %p224
        %s396 = sand.u32 %s31, 1
        %s397 = scalar_lea.sflag [#allocation12], %s396
        %s398 = sand.u32 %s214, 1
        %s399 = smul.addr %s398, 32
        %s400 = scalar_lea.vmem [#allocation11], %s399
        %p401 = pneg %p255
        %p402 = pneg %p252
        %s403 = sand.u32 %s31, 1
        %s404 = scalar_lea.sflag [#allocation12], %s403
        %s405 = sand.u32 %s242, 1
        %s406 = smul.addr %s405, 32
        %s407 = scalar_lea.vmem [#allocation13], %s406
        %s408 = smul.u32 2, %s36
        %s409 = smul.u32 2, %s36
        %s410 = smul.u32 2, %s36
        %s411 = smul.u32 2, %s36
        %v413 = vld [vmem:[%s353] sm:$0xff]
        %v414 = vld [vmem:[%s353 + $0x8] sm:$0xff]
        %vm415 = vcmask 523264
        %v416 = vsel %vm415, %v413, 0.0
        %417 = vadd.xlane.f32.xlu0 %v416
        %v418 = vpop.xlane.xlu0 %417
        %v419 = vsel %vm415, %v414, 0.0
        %420 = vadd.xlane.f32.xlu0 %v419
        %v421 = vpop.xlane.xlu0 %420
        %v422 = vrcp.pop 64.0
        %v423 = vmul.f32 %v418, %v422
        %v424 = vmul.f32 %v421, %v422
        %v425 = vsub.f32 %v413, %v423
        %v426 = vsub.f32 %v414, %v424
        %v427 = vmul.f32 %v425, %v425
        %v428 = vmul.f32 %v426, %v426
        %v429 = vsel %vm415, %v427, 0.0
        %430 = vadd.xlane.f32.xlu0 %v429
        %v431 = vpop.xlane.xlu0 %430
        %v432 = vsel %vm415, %v428, 0.0
        %433 = vadd.xlane.f32.xlu0 %v432
        %v434 = vpop.xlane.xlu0 %433
        %v435 = vmul.f32 %v431, %v422
        %v436 = vmul.f32 %v434, %v422
        %v437 = vadd.f32 %v435, 1e-06
        %v438 = vadd.f32 %v436, 1e-06
        %v439 = vrsqrt.pop %v437
        %v440 = vrsqrt.pop %v438
        %v441 = vmul.f32 %v425, %v439
        %v442 = vmul.f32 %v426, %v440
        %v443 = vld [vmem:[%s1] sm:$0x1]
        %v445 = vlaneseq
        %v446 = vshrl.u32 %v445, 7
        %v447 = vsub.s32 0, %v446
        %v448 = vrot.slane %v443, %v447
        %v450 = vmul.f32 %v441, %v448
        %v451 = vmul.f32 %v442, %v448
        %v452 = vld [vmem:[%s2] sm:$0x1]
        %v454 = vlaneseq
        %v455 = vshrl.u32 %v454, 7
        %v456 = vsub.s32 0, %v455
        %v457 = vrot.slane %v452, %v456
        %v459 = vadd.f32 %v450, %v457
        %v460 = vadd.f32 %v451, %v457
        %v461 = vpack.c.bf16 %v460, %v459
        %v462 = vld [vmem:[#allocation5] sm:$0xf]
        %v463 = vld [vmem:[#allocation5 + $0x4] sm:$0xf]
        %v464 = vld [vmem:[#allocation5 + $0x8] sm:$0xf]
        %v465 = vld [vmem:[#allocation5 + $0xc] sm:$0xf]
        %v466 = vld [vmem:[#allocation5 + $0x10] sm:$0xf]
        %v467 = vld [vmem:[#allocation5 + $0x14] sm:$0xf]
        %v468 = vld [vmem:[#allocation5 + $0x18] sm:$0xf]
        %v469 = vld [vmem:[#allocation5 + $0x1c] sm:$0xf]
        %v478 = vunpack.c.l.b16 %v462
        %v479 = vunpack.c.l.b16 %v463
        %v480 = vunpack.c.l.b16 %v464
        %v481 = vunpack.c.l.b16 %v465
        %v482 = vunpack.c.l.b16 %v466
        %v483 = vunpack.c.l.b16 %v467
        %v484 = vunpack.c.l.b16 %v468
        %v485 = vunpack.c.l.b16 %v469
        %v486 = vpack.c.b16 %v479, %v478
        %v487 = vpack.c.b16 %v481, %v480
        %v488 = vpack.c.b16 %v483, %v482
        %v489 = vpack.c.b16 %v485, %v484
        %v495 = vsel %vm415, %v461, 0
        %497 = vmatprep.subr.bf16.mxu0 0
        %498 = vmatpush1.bf16.msra.mxu0 %v486
        %499 = vmatprep.subr.bf16.mxu0 0
        %500 = vmatpush1.bf16.msra.mxu0 %v487
        %501 = vmatprep.subr.bf16.mxu0 0
        %502 = vmatpush1.bf16.msra.mxu0 %v488
        %503 = vmatprep.subr.bf16.mxu0 0
        %504 = vmatpush1.bf16.msra.mxu0 %v489
        %505 = vmatprep.subr.bf16.mxu0 0
        %506 = vmatpush1.bf16.msra.mxu0 0
        %507 = vmatprep.subr.bf16.mxu0 0
        %508 = vmatpush1.bf16.msra.mxu0 0
        %509 = vmatprep.subr.bf16.mxu0 0
        %510 = vmatpush1.bf16.msra.mxu0 0
        %511 = vmatprep.subr.bf16.mxu0 0
        %512 = vmatpush1.bf16.msra.mxu0 0
        %513 = vmatprep.subr.bf16.mxu0 0
        %514 = vmatpush1.bf16.msra.mxu0 0
        %515 = vmatprep.subr.bf16.mxu0 0
        %516 = vmatpush1.bf16.msra.mxu0 0
        %517 = vmatprep.subr.bf16.mxu0 0
        %518 = vmatpush1.bf16.msra.mxu0 0
        %519 = vmatprep.subr.bf16.mxu0 0
        %520 = vmatpush1.bf16.msra.mxu0 0
        %521 = vmatprep.subr.bf16.mxu0 0
        %522 = vmatpush1.bf16.msra.mxu0 0
        %523 = vmatprep.subr.bf16.mxu0 0
        %524 = vmatpush1.bf16.msra.mxu0 0
        %525 = vmatprep.subr.bf16.mxu0 0
        %526 = vmatpush1.bf16.msra.mxu0 0
        %527 = vmatprep.subr.bf16.mxu0 0
        %528 = vmatpush1.bf16.msra.mxu0 0
        %529 = vmatprep.mubr.bf16.mxu0 0
        %530 = vmatmul.mubr.bf16.gmra.mrb[0].mxu0 %v495
        %v531 = vpop.f32.mrb[0].mxu0
        %v532 = vadd.f32 0.0, %v531
        %v533 = vpop.f32.mrb[0].mxu0
        %v534 = vpop.f32.mrb[0].mxu0
        %v535 = vadd.f32 0.0, %v534
        %v536 = vpop.f32.mrb[0].mxu0
        %537 = vdwg.mxu0
        %v538 = vld [vmem:[#allocation7] sm:$0xf]
        %v539 = vld [vmem:[#allocation7 + $0x4] sm:$0xf]
        %v540 = vld [vmem:[#allocation7 + $0x8] sm:$0xf]
        %v541 = vld [vmem:[#allocation7 + $0xc] sm:$0xf]
        %v542 = vld [vmem:[#allocation7 + $0x10] sm:$0xf]
        %v543 = vld [vmem:[#allocation7 + $0x14] sm:$0xf]
        %v544 = vld [vmem:[#allocation7 + $0x18] sm:$0xf]
        %v545 = vld [vmem:[#allocation7 + $0x1c] sm:$0xf]
        %v554 = vunpack.c.l.b16 %v538
        %v555 = vunpack.c.l.b16 %v539
        %v556 = vunpack.c.l.b16 %v540
        %v557 = vunpack.c.l.b16 %v541
        %v558 = vunpack.c.l.b16 %v542
        %v559 = vunpack.c.l.b16 %v543
        %v560 = vunpack.c.l.b16 %v544
        %v561 = vunpack.c.l.b16 %v545
        %v562 = vpack.c.b16 %v555, %v554
        %v563 = vpack.c.b16 %v557, %v556
        %v564 = vpack.c.b16 %v559, %v558
        %v565 = vpack.c.b16 %v561, %v560
        %570 = vmatprep.subr.bf16.mxu0 0
        %571 = vmatpush1.bf16.msra.mxu0 %v562
        %572 = vmatprep.subr.bf16.mxu0 0
        %573 = vmatpush1.bf16.msra.mxu0 %v563
        %574 = vmatprep.subr.bf16.mxu0 0
        %575 = vmatpush1.bf16.msra.mxu0 %v564
        %576 = vmatprep.subr.bf16.mxu0 0
        %577 = vmatpush1.bf16.msra.mxu0 %v565
        %578 = vmatprep.subr.bf16.mxu0 0
        %579 = vmatpush1.bf16.msra.mxu0 0
        %580 = vmatprep.subr.bf16.mxu0 0
        %581 = vmatpush1.bf16.msra.mxu0 0
        %582 = vmatprep.subr.bf16.mxu0 0
        %583 = vmatpush1.bf16.msra.mxu0 0
        %584 = vmatprep.subr.bf16.mxu0 0
        %585 = vmatpush1.bf16.msra.mxu0 0
        %586 = vmatprep.subr.bf16.mxu0 0
        %587 = vmatpush1.bf16.msra.mxu0 0
        %588 = vmatprep.subr.bf16.mxu0 0
        %589 = vmatpush1.bf16.msra.mxu0 0
        %590 = vmatprep.subr.bf16.mxu0 0
        %591 = vmatpush1.bf16.msra.mxu0 0
        %592 = vmatprep.subr.bf16.mxu0 0
        %593 = vmatpush1.bf16.msra.mxu0 0
        %594 = vmatprep.subr.bf16.mxu0 0
        %595 = vmatpush1.bf16.msra.mxu0 0
        %596 = vmatprep.subr.bf16.mxu0 0
        %597 = vmatpush1.bf16.msra.mxu0 0
        %598 = vmatprep.subr.bf16.mxu0 0
        %599 = vmatpush1.bf16.msra.mxu0 0
        %600 = vmatprep.subr.bf16.mxu0 0
        %601 = vmatpush1.bf16.msra.mxu0 0
        %602 = vmatprep.mubr.bf16.mxu0 0
        %603 = vmatmul.mubr.bf16.gmra.mrb[0].mxu0 %v495
        %v604 = vpop.f32.mrb[0].mxu0
        %v605 = vadd.f32 0.0, %v604
        %v606 = vpop.f32.mrb[0].mxu0
        %v607 = vpop.f32.mrb[0].mxu0
        %v608 = vadd.f32 0.0, %v607
        %v609 = vpop.f32.mrb[0].mxu0
        %610 = vdwg.mxu0
        %v611 = vld [vmem:[#allocation8] sm:$0xf]
        %v612 = vld [vmem:[#allocation8 + $0x4] sm:$0xf]
        %v613 = vld [vmem:[#allocation8 + $0x8] sm:$0xf]
        %v614 = vld [vmem:[#allocation8 + $0xc] sm:$0xf]
        %v615 = vld [vmem:[#allocation8 + $0x10] sm:$0xf]
        %v616 = vld [vmem:[#allocation8 + $0x14] sm:$0xf]
        %v617 = vld [vmem:[#allocation8 + $0x18] sm:$0xf]
        %v618 = vld [vmem:[#allocation8 + $0x1c] sm:$0xf]
        %v627 = vunpack.c.l.b16 %v611
        %v628 = vunpack.c.l.b16 %v612
        %v629 = vunpack.c.l.b16 %v613
        %v630 = vunpack.c.l.b16 %v614
        %v631 = vunpack.c.l.b16 %v615
        %v632 = vunpack.c.l.b16 %v616
        %v633 = vunpack.c.l.b16 %v617
        %v634 = vunpack.c.l.b16 %v618
        %v635 = vpack.c.b16 %v628, %v627
        %v636 = vpack.c.b16 %v630, %v629
        %v637 = vpack.c.b16 %v632, %v631
        %v638 = vpack.c.b16 %v634, %v633
        %643 = vmatprep.subr.bf16.mxu0 0
        %644 = vmatpush1.bf16.msra.mxu0 %v635
        %645 = vmatprep.subr.bf16.mxu0 0
        %646 = vmatpush1.bf16.msra.mxu0 %v636
        %647 = vmatprep.subr.bf16.mxu0 0
        %648 = vmatpush1.bf16.msra.mxu0 %v637
        %649 = vmatprep.subr.bf16.mxu0 0
        %650 = vmatpush1.bf16.msra.mxu0 %v638
        %651 = vmatprep.subr.bf16.mxu0 0
        %652 = vmatpush1.bf16.msra.mxu0 0
        %653 = vmatprep.subr.bf16.mxu0 0
        %654 = vmatpush1.bf16.msra.mxu0 0
        %655 = vmatprep.subr.bf16.mxu0 0
        %656 = vmatpush1.bf16.msra.mxu0 0
        %657 = vmatprep.subr.bf16.mxu0 0
        %658 = vmatpush1.bf16.msra.mxu0 0
        %659 = vmatprep.subr.bf16.mxu0 0
        %660 = vmatpush1.bf16.msra.mxu0 0
        %661 = vmatprep.subr.bf16.mxu0 0
        %662 = vmatpush1.bf16.msra.mxu0 0
        %663 = vmatprep.subr.bf16.mxu0 0
        %664 = vmatpush1.bf16.msra.mxu0 0
        %665 = vmatprep.subr.bf16.mxu0 0
        %666 = vmatpush1.bf16.msra.mxu0 0
        %667 = vmatprep.subr.bf16.mxu0 0
        %668 = vmatpush1.bf16.msra.mxu0 0
        %669 = vmatprep.subr.bf16.mxu0 0
        %670 = vmatpush1.bf16.msra.mxu0 0
        %671 = vmatprep.subr.bf16.mxu0 0
        %672 = vmatpush1.bf16.msra.mxu0 0
        %673 = vmatprep.subr.bf16.mxu0 0
        %674 = vmatpush1.bf16.msra.mxu0 0
        %675 = vmatprep.mubr.bf16.mxu0 0
        %676 = vmatmul.mubr.bf16.gmra.mrb[0].mxu0 %v495
        %v677 = vpop.f32.mrb[0].mxu0
        %v678 = vadd.f32 0.0, %v677
        %v679 = vpop.f32.mrb[0].mxu0
        %v680 = vpop.f32.mrb[0].mxu0
        %v681 = vadd.f32 0.0, %v680
        %v682 = vpop.f32.mrb[0].mxu0
        %683 = vdwg.mxu0
        %v684 = vpack.c.bf16 %v535, %v532
        %v686 = vunpack.c.l.b16 %v684
        %v687 = vunpack.c.h.b16 %v684
        %v688 = vpack.c.b16 %v686, %v686
        %v689 = vpack.c.b16 %v687, %v687
        %vm692 = vcmask 125952
        %693 = vst.msk [vmem:[%s393] sm:$0xf] %vm692, %v688
        %694 = vst.msk [vmem:[%s393 + $0x4] sm:$0xf] %vm692, %v689
        %v695 = vpack.c.bf16 %v608, %v605
        %v697 = vunpack.c.l.b16 %v695
        %v698 = vunpack.c.h.b16 %v695
        %v699 = vpack.c.b16 %v697, %v697
        %v700 = vpack.c.b16 %v698, %v698
        %703 = vst.msk [vmem:[%s400] sm:$0xf] %vm692, %v699
        %704 = vst.msk [vmem:[%s400 + $0x4] sm:$0xf] %vm692, %v700
        %v705 = vpack.c.bf16 %v681, %v678
        %v707 = vunpack.c.l.b16 %v705
        %v708 = vunpack.c.h.b16 %v705
        %v709 = vpack.c.b16 %v707, %v707
        %v710 = vpack.c.b16 %v708, %v708
        %713 = vst.msk [vmem:[%s407] sm:$0xf] %vm692, %v709
        %714 = vst.msk [vmem:[%s407 + $0x4] sm:$0xf] %vm692, %v710
        %715 = vrot.lane.b32.xlu0 %v688, 112
        %v716 = vpop.permute.xlu0 %715
        %717 = vrot.lane.b32.xlu0 %v689, 112
        %v718 = vpop.permute.xlu0 %717
        %s721 = scalar_lea.vmem %s393, 8 [#allocation10]
        %722 = vst.msk [vmem:[%s721] sm:$0xf] %vm692, %v716
        %723 = vst.msk [vmem:[%s721 + $0x4] sm:$0xf] %vm692, %v718
        %724 = vrot.lane.b32.xlu0 %v699, 112
        %v725 = vpop.permute.xlu0 %724
        %726 = vrot.lane.b32.xlu0 %v700, 112
        %v727 = vpop.permute.xlu0 %726
        %s730 = scalar_lea.vmem %s400, 8 [#allocation11]
        %731 = vst.msk [vmem:[%s730] sm:$0xf] %vm692, %v725
        %732 = vst.msk [vmem:[%s730 + $0x4] sm:$0xf] %vm692, %v727
        %733 = vrot.lane.b32.xlu0 %v709, 112
        %v734 = vpop.permute.xlu0 %733
        %735 = vrot.lane.b32.xlu0 %v710, 112
        %v736 = vpop.permute.xlu0 %735
        %s739 = scalar_lea.vmem %s407, 8 [#allocation13]
        %740 = vst.msk [vmem:[%s739] sm:$0xf] %vm692, %v734
        %741 = vst.msk [vmem:[%s739 + $0x4] sm:$0xf] %vm692, %v736
        %742 = vrot.lane.b32.xlu0 %v688, 96
        %v743 = vpop.permute.xlu0 %742
        %744 = vrot.lane.b32.xlu0 %v689, 96
        %v745 = vpop.permute.xlu0 %744
        %s748 = scalar_lea.vmem %s393, 16 [#allocation10]
        %749 = vst.msk [vmem:[%s748] sm:$0xf] %vm692, %v743
        %750 = vst.msk [vmem:[%s748 + $0x4] sm:$0xf] %vm692, %v745
        %751 = vrot.lane.b32.xlu0 %v699, 96
        %v752 = vpop.permute.xlu0 %751
        %753 = vrot.lane.b32.xlu0 %v700, 96
        %v754 = vpop.permute.xlu0 %753
        %s757 = scalar_lea.vmem %s400, 16 [#allocation11]
        %758 = vst.msk [vmem:[%s757] sm:$0xf] %vm692, %v752
        %759 = vst.msk [vmem:[%s757 + $0x4] sm:$0xf] %vm692, %v754
        %760 = vrot.lane.b32.xlu0 %v709, 96
        %v761 = vpop.permute.xlu0 %760
        %762 = vrot.lane.b32.xlu0 %v710, 96
        %v763 = vpop.permute.xlu0 %762
        %s766 = scalar_lea.vmem %s407, 16 [#allocation13]
        %767 = vst.msk [vmem:[%s766] sm:$0xf] %vm692, %v761
        %768 = vst.msk [vmem:[%s766 + $0x4] sm:$0xf] %vm692, %v763
        %769 = vrot.lane.b32.xlu0 %v688, 80
        %v770 = vpop.permute.xlu0 %769
        %771 = vrot.lane.b32.xlu0 %v689, 80
        %v772 = vpop.permute.xlu0 %771
        %s775 = scalar_lea.vmem %s393, 24 [#allocation10]
        %776 = vst.msk [vmem:[%s775] sm:$0xf] %vm692, %v770
        %777 = vst.msk [vmem:[%s775 + $0x4] sm:$0xf] %vm692, %v772
        %778 = vrot.lane.b32.xlu0 %v699, 80
        %v779 = vpop.permute.xlu0 %778
        %780 = vrot.lane.b32.xlu0 %v700, 80
        %v781 = vpop.permute.xlu0 %780
        %s784 = scalar_lea.vmem %s400, 24 [#allocation11]
        %785 = vst.msk [vmem:[%s784] sm:$0xf] %vm692, %v779
        %786 = vst.msk [vmem:[%s784 + $0x4] sm:$0xf] %vm692, %v781
        %787 = vrot.lane.b32.xlu0 %v709, 80
        %v788 = vpop.permute.xlu0 %787
        %789 = vrot.lane.b32.xlu0 %v710, 80
        %v790 = vpop.permute.xlu0 %789
        %s793 = scalar_lea.vmem %s407, 24 [#allocation13]
        %794 = vst.msk [vmem:[%s793] sm:$0xf] %vm692, %v788
        %795 = vst.msk [vmem:[%s793 + $0x4] sm:$0xf] %vm692, %v790
        %s796 = sand.u32 %s186, 1
        %s797 = scalar_lea.sflag [#allocation4], %s796
        %s798 = sand.u32 %s186, 1
        %s799 = smul.addr %s798, 32
        %s800 = scalar_lea.vmem [#allocation10], %s799
        %s801 = sand.u32 %s31, 1
        %s802 = scalar_lea.sflag [#allocation12], %s801
        %s803 = sand.u32 %s214, 1
        %s804 = smul.addr %s803, 32
        %s805 = scalar_lea.vmem [#allocation11], %s804
        %s806 = sand.u32 %s31, 1
        %s807 = scalar_lea.sflag [#allocation12], %s806
        %s808 = sand.u32 %s242, 1
        %s809 = smul.addr %s808, 32
        %s810 = scalar_lea.vmem [#allocation13], %s809
        // Predicated region
        $region61: #{tpu_custom_call.1} parent=43 // pred_check
          %p811 = pneg %p196
        $region62: #{tpu_custom_call.1} parent=43 // pred_check_branch
          %813 = sbr.rel (%p811) target = $region64
        $region63: #{tpu_custom_call.1} parent=43 // pred_region
          %s814 = smul.u32 2, %s36
          %s816 = ssub.s32 512, 512
          %817 = vsyncadd %s797, %s816
          %s818 = smul.addr %s35, 8
          %s819 = sadd.s32 %s814, %s818
          %s820 = smul.addr %s819, 64
          %s821 = scalar_lea.hbm %s6, %s820
          %s822 = sshll.u32 %s800, 4
          %s823 = int_to_ptr.vmem [resolvable:$true] %s822
          %828 = dma.vmem_to_hbm [thread:$0]  %s823, 512, %s821, %s797, 64, 64, 4
        $region64: #{tpu_custom_call.1} parent=43 // pred_fallthru
          _
        // Predicated region
        $region65: #{tpu_custom_call.1} parent=43 // pred_check
          %p829 = pneg %p224
        $region66: #{tpu_custom_call.1} parent=43 // pred_check_branch
          %831 = sbr.rel (%p829) target = $region68
        $region67: #{tpu_custom_call.1} parent=43 // pred_region
          %s832 = smul.u32 2, %s36
          %s834 = ssub.s32 512, 512
          %835 = vsyncadd %s802, %s834
          %s836 = smul.addr %s35, 8
          %s837 = sadd.s32 %s832, %s836
          %s838 = smul.addr %s837, 64
          %s839 = scalar_lea.hbm %s7, %s838
          %s840 = sshll.u32 %s805, 4
          %s841 = int_to_ptr.vmem [resolvable:$true] %s840
          %846 = dma.vmem_to_hbm [thread:$0]  %s841, 512, %s839, %s802, 64, 64, 4
        $region68: #{tpu_custom_call.1} parent=43 // pred_fallthru
          _
        // Predicated region
        $region69: #{tpu_custom_call.1} parent=43 // pred_check
          %p847 = pneg %p252
        $region70: #{tpu_custom_call.1} parent=43 // pred_check_branch
          %849 = sbr.rel (%p847) target = $region72
        $region71: #{tpu_custom_call.1} parent=43 // pred_region
          %s850 = smul.u32 2, %s36
          %s852 = ssub.s32 512, 512
          %853 = vsyncadd %s807, %s852
          %s854 = smul.addr %s35, 8
          %s855 = sadd.s32 %s850, %s854
          %s856 = smul.addr %s855, 64
          %s857 = scalar_lea.hbm %s8, %s856
          %s858 = sshll.u32 %s810, 4
          %s859 = int_to_ptr.vmem [resolvable:$true] %s858
          %864 = dma.vmem_to_hbm [thread:$0]  %s859, 512, %s857, %s807, 64, 64, 4
        $region72: #{tpu_custom_call.1} parent=43 // pred_fallthru
          _
      $region44: #{tpu_custom_call.1} parent=5 // pred_fallthru
        _
      %p865 = scmp.le.s32.totalorder 2, %s26
      // Predicated region
      $region73: #{tpu_custom_call.1} parent=5 // pred_check
        %p866 = pneg %p865
      $region74: #{tpu_custom_call.1} parent=5 // pred_check_branch
        %868 = sbr.rel (%p866) target = $region76
      $region75: #{tpu_custom_call.1} parent=5 // pred_region
        %s869 = ssub.s32 %s26, 2
        // Predicated region
        $region77: #{tpu_custom_call.1} parent=75 // pred_check
          %p870 = pneg %p202
        $region78: #{tpu_custom_call.1} parent=75 // pred_check_branch
          %872 = sbr.rel (%p870) target = $region80
        $region79: #{tpu_custom_call.1} parent=75 // pred_region
          %s873 = sand.u32 %s187, 1
          %s874 = scalar_lea.sflag [#allocation4], %s873
          %s875 = sand.u32 %s187, 1
          %s876 = smul.addr %s875, 32
          %s877 = scalar_lea.vmem [#allocation10], %s876
          %878 = dma.done %s874, 512
        $region80: #{tpu_custom_call.1} parent=75 // pred_fallthru
          _
        // Predicated region
        $region81: #{tpu_custom_call.1} parent=75 // pred_check
          %p879 = pneg %p230
        $region82: #{tpu_custom_call.1} parent=75 // pred_check_branch
          %881 = sbr.rel (%p879) target = $region84
        $region83: #{tpu_custom_call.1} parent=75 // pred_region
          %s882 = sand.u32 %s32, 1
          %s883 = scalar_lea.sflag [#allocation12], %s882
          %s884 = sand.u32 %s215, 1
          %s885 = smul.addr %s884, 32
          %s886 = scalar_lea.vmem [#allocation11], %s885
          %887 = dma.done %s883, 512
        $region84: #{tpu_custom_call.1} parent=75 // pred_fallthru
          _
        // Predicated region
        $region85: #{tpu_custom_call.1} parent=75 // pred_check
          %p888 = pneg %p258
        $region86: #{tpu_custom_call.1} parent=75 // pred_check_branch
          %890 = sbr.rel (%p888) target = $region88
        $region87: #{tpu_custom_call.1} parent=75 // pred_region
          %s891 = sand.u32 %s32, 1
          %s892 = scalar_lea.sflag [#allocation12], %s891
          %s893 = sand.u32 %s243, 1
          %s894 = smul.addr %s893, 32
          %s895 = scalar_lea.vmem [#allocation13], %s894
          %896 = dma.done %s892, 512
        $region88: #{tpu_custom_call.1} parent=75 // pred_fallthru
          _
      $region76: #{tpu_custom_call.1} parent=5 // pred_fallthru
        _
    $region6: #{tpu_custom_call.1} parent=1 // loop_footer
      %s30 = sadd.s32 1, %s26
    $region7: #{tpu_custom_call.1} parent=1 // loop_footer_branch
      %25 = sbr.rel target = $region3
    $region8: #{tpu_custom_call.1} parent=1 // loop_exit
      _
    %897 = vsyncpa [#allocation3], 1
    %s898 = scalar_lea.sflag [#allocation3], 1
    %899 = vsyncpa %s898, 1
    %900 = vsyncpa [#allocation6], 1
    %901 = vsyncpa [#allocation9], 1
    %902 = vsyncpa [#allocation4], 1
    %s903 = scalar_lea.sflag [#allocation4], 1
    %904 = vsyncpa %s903, 1
    %905 = vsyncpa [#allocation12], 1
    %s906 = scalar_lea.sflag [#allocation12], 1
    %907 = vsyncpa %s906, 1

// kernel: tpu_custom_call.1
$region0: #{tpu_custom_call.1}
  #allocation0 [shape = 'u32[]', space=smem, size = 0x4, offset = 0x4, fixed_abs, tag = 'smem constant byte address 0x4 - core index']
  #allocation1 [shape = 'u32[144,128]{1,0:T(1,128)}', space=vmem, size = 0x12000, scoped, tag = 'internal scratch']
  %s0 = inlined_call_operand.hbm [shape: f32[2,16,64], index: 0, kind: input, shape index: {}]
  %s1 = inlined_call_operand.vmem [shape: f32[1,64], index: 1, kind: input, shape index: {}]
  %s2 = inlined_call_operand.vmem [shape: f32[1,64], index: 2, kind: input, shape index: {}]
  %s3 = inlined_call_operand.hbm [shape: bf16[64,64], index: 3, kind: input, shape index: {}]
  %s4 = inlined_call_operand.hbm [shape: bf16[64,64], index: 4, kind: input, shape index: {}]
  %s5 = inlined_call_operand.hbm [shape: bf16[64,64], index: 5, kind: input, shape index: {}]
  %s6 = inlined_call_operand.hbm [shape: bf16[2,4,16,16], index: 6, kind: output, shape index: {0}]
  %s7 = inlined_call_operand.hbm [shape: bf16[2,4,16,16], index: 7, kind: output, shape index: {1}]
  %s8 = inlined_call_operand.hbm [shape: bf16[2,4,16,16], index: 8, kind: output, shape index: {2}]
  %9 = xla_tuple %s6, %s7, %s8
  %s10 = sld [smem:[#allocation0]]
  $region89: #{tpu_custom_call.1} parent=0
    _
  %s12 = ssub.s32 1, %s10
  %s13 = scalar_select 0, %s12, %s10
  $region1: #{tpu_custom_call.1} parent=0
    #allocation2 [shape = 'u8[16384]{0}', space=vmem, size = 0x4000, scoped, tag = 'input window, operand 0']
    #allocation3 [shape = 's32[2]{0}', space=sflag, size = 0x8, scoped, tag = 'scoped memory for tpu_custom_call.1']
    #allocation4 [shape = 's32[2]{0}', space=sflag, size = 0x8, scoped, tag = 'scoped memory for tpu_custom_call.1']
    #allocation5 [shape = 'u8[16384]{0}', space=vmem, size = 0x4000, scoped, tag = 'input window, operand 3, single buffered']
    #allocation6 [shape = 's32[1]{0}', space=sflag, size = 0x4, scoped, tag = 'scoped memory for tpu_custom_call.1']
    #allocation7 [shape = 'u8[16384]{0}', space=vmem, size = 0x4000, scoped, tag = 'input window, operand 4, single buffered']
    #allocation8 [shape = 'u8[16384]{0}', space=vmem, size = 0x4000, scoped, tag = 'input window, operand 5, single buffered']
    #allocation9 [shape = 's32[1]{0}', space=sflag, size = 0x4, scoped, tag = 'scoped memory for tpu_custom_call.1']
    #allocation10 [shape = 'u8[32768]{0}', space=vmem, size = 0x8000, scoped, tag = 'output window, operand 0']
    #allocation11 [shape = 'u8[32768]{0}', space=vmem, size = 0x8000, scoped, tag = 'output window, operand 1']
    #allocation12 [shape = 's32[2]{0}', space=sflag, size = 0x8, scoped, tag = 'scoped memory for tpu_custom_call.1']
    #allocation13 [shape = 'u8[32768]{0}', space=vmem, size = 0x8000, scoped, tag = 'output window, operand 2']
    %14 = vsyncpa [#allocation3], 0
    %s15 = scalar_lea.sflag [#allocation3], 1
    %16 = vsyncpa %s15, 0
    %17 = vsyncpa [#allocation6], 0
    %18 = vsyncpa [#allocation9], 0
    %19 = vsyncpa [#allocation4], 0
    %s20 = scalar_lea.sflag [#allocation4], 1
    %21 = vsyncpa %s20, 0
    %22 = vsyncpa [#allocation12], 0
    %s23 = scalar_lea.sflag [#allocation12], 1
    %24 = vsyncpa %s23, 0
    loop: start=0, step=1, limit=4
    $region2: #{tpu_custom_call.1} parent=1 // loop_pre_header
      _
    $region3: #{tpu_custom_call.1} parent=1 // loop_header
      %s26 = sphi 0, %s30
      %p27 = scmp.ge.s32.totalorder %s26, 4
      %s33 = sphi 0, %s45
      %s34 = sphi 0, %s41
      %s35 = sphi 0, %s33
      %s36 = sphi 0, %s34
      %s37 = sphi 0, %s35
      %s38 = sphi 0, %s36
      %s50 = sphi 0, %s52
      %s53 = sphi 0, %s50
      %s54 = sphi 0, %s53
      %s70 = sphi 0, %s54
      %s74 = sphi 0, %s74
      %s76 = sphi 0, %s74
      %s77 = sphi 0, %s76
      %s91 = sphi 0, %s77
      %s95 = sphi 0, %s95
      %s97 = sphi 0, %s95
      %s98 = sphi 0, %s97
      %s112 = sphi 0, %s98
      %s116 = sphi 0, %s116
      %s118 = sphi 0, %s116
      %s119 = sphi 0, %s118
      %s133 = sphi 0, %s119
      %s137 = sphi 0, %s137
      %s139 = sphi 0, %s137
      %s140 = sphi 0, %s139
      %s154 = sphi 0, %s140
      %s158 = sphi 0, %s158
      %s160 = sphi 0, %s158
      %s161 = sphi 0, %s160
      %s175 = sphi 0, %s161
      %s183 = sphi 0, %s185
      %s186 = sphi 0, %s183
      %s187 = sphi 0, %s186
      %s203 = sphi 0, %s187
      %s211 = sphi 0, %s213
      %s214 = sphi 0, %s211
      %s215 = sphi 0, %s214
      %s231 = sphi 0, %s215
      %s239 = sphi 0, %s241
      %s242 = sphi 0, %s239
      %s243 = sphi 0, %s242
      %s259 = sphi 0, %s243
    $region4: #{tpu_custom_call.1} parent=1 // loop_header_branch
      %29 = sbr.rel (%p27) target = $region8
    $region5: #{tpu_custom_call.1} parent=1 // loop_body
      %s31 = ssub.s32 %s26, 1
      %s32 = ssub.s32 %s26, 2
      %s39 = sadd.s32 1, %s34
      %p40 = scmp.ge.s32.totalorder %s39, 1
      %s41 = scalar_select %p40, 0, %s39
      %s42 = sadd.s32 1, %s33
      %s43 = scalar_select %p40, %s42, %s33
      %p44 = scmp.ge.s32.totalorder %s43, 2
      %s45 = scalar_select %p44, 0, %s43
      %s46 = ssub.s32 %s33, %s45
      %s47 = ssub.s32 %s34, %s41
      %s48 = sor.u32 %s46, %s47
      %p49 = scmp.eq.s32.totalorder %s48, 0
      %s51 = sadd.s32 %s50, 1
      %s52 = scalar_select %p49, %s50, %s51
      %p55 = pneg %p49
      %p56 = scmp.eq.s32.totalorder %s26, 1
      %p57 = por %p55, %p56
      %p58 = scmp.ne.s32.totalorder %s50, %s53
      %p59 = scmp.eq.s32.totalorder %s26, 0
      %p60 = por %p58, %p59
      %p61 = scmp.ne.s32.totalorder %s50, %s53
      %p62 = scmp.eq.s32.totalorder %s31, 1
      %p63 = por %p61, %p62
      %p64 = scmp.ne.s32.totalorder %s53, %s54
      %p65 = scmp.eq.s32.totalorder %s31, 0
      %p66 = por %p64, %p65
      %p67 = scmp.ne.s32.totalorder %s53, %s54
      %p68 = scmp.eq.s32.totalorder %s32, 1
      %p69 = por %p67, %p68
      %p71 = scmp.ne.s32.totalorder %s54, %s70
      %p72 = scmp.eq.s32.totalorder %s32, 0
      %p73 = por %p71, %p72
      %s75 = sadd.s32 %s74, 1
      %p78 = scmp.eq.s32.totalorder %s26, 1
      %p79 = scmp.ne.s32.totalorder %s74, %s76
      %p80 = scmp.eq.s32.totalorder %s26, 0
      %p81 = por %p79, %p80
      %p82 = scmp.ne.s32.totalorder %s74, %s76
      %p83 = scmp.eq.s32.totalorder %s31, 1
      %p84 = por %p82, %p83
      %p85 = scmp.ne.s32.totalorder %s76, %s77
      %p86 = scmp.eq.s32.totalorder %s31, 0
      %p87 = por %p85, %p86
      %p88 = scmp.ne.s32.totalorder %s76, %s77
      %p89 = scmp.eq.s32.totalorder %s32, 1
      %p90 = por %p88, %p89
      %p92 = scmp.ne.s32.totalorder %s77, %s91
      %p93 = scmp.eq.s32.totalorder %s32, 0
      %p94 = por %p92, %p93
      %s96 = sadd.s32 %s95, 1
      %p99 = scmp.eq.s32.totalorder %s26, 1
      %p100 = scmp.ne.s32.totalorder %s95, %s97
      %p101 = scmp.eq.s32.totalorder %s26, 0
      %p102 = por %p100, %p101
      %p103 = scmp.ne.s32.totalorder %s95, %s97
      %p104 = scmp.eq.s32.totalorder %s31, 1
      %p105 = por %p103, %p104
      %p106 = scmp.ne.s32.totalorder %s97, %s98
      %p107 = scmp.eq.s32.totalorder %s31, 0
      %p108 = por %p106, %p107
      %p109 = scmp.ne.s32.totalorder %s97, %s98
      %p110 = scmp.eq.s32.totalorder %s32, 1
      %p111 = por %p109, %p110
      %p113 = scmp.ne.s32.totalorder %s98, %s112
      %p114 = scmp.eq.s32.totalorder %s32, 0
      %p115 = por %p113, %p114
      %s117 = sadd.s32 %s116, 1
      %p120 = scmp.eq.s32.totalorder %s26, 1
      %p121 = scmp.ne.s32.totalorder %s116, %s118
      %p122 = scmp.eq.s32.totalorder %s26, 0
      %p123 = por %p121, %p122
      %p124 = scmp.ne.s32.totalorder %s116, %s118
      %p125 = scmp.eq.s32.totalorder %s31, 1
      %p126 = por %p124, %p125
      %p127 = scmp.ne.s32.totalorder %s118, %s119
      %p128 = scmp.eq.s32.totalorder %s31, 0
      %p129 = por %p127, %p128
      %p130 = scmp.ne.s32.totalorder %s118, %s119
      %p131 = scmp.eq.s32.totalorder %s32, 1
      %p132 = por %p130, %p131
      %p134 = scmp.ne.s32.totalorder %s119, %s133
      %p135 = scmp.eq.s32.totalorder %s32, 0
      %p136 = por %p134, %p135
      %s138 = sadd.s32 %s137, 1
      %p141 = scmp.eq.s32.totalorder %s26, 1
      %p142 = scmp.ne.s32.totalorder %s137, %s139
      %p143 = scmp.eq.s32.totalorder %s26, 0
      %p144 = por %p142, %p143
      %p145 = scmp.ne.s32.totalorder %s137, %s139
      %p146 = scmp.eq.s32.totalorder %s31, 1
      %p147 = por %p145, %p146
      %p148 = scmp.ne.s32.totalorder %s139, %s140
      %p149 = scmp.eq.s32.totalorder %s31, 0
      %p150 = por %p148, %p149
      %p151 = scmp.ne.s32.totalorder %s139, %s140
      %p152 = scmp.eq.s32.totalorder %s32, 1
      %p153 = por %p151, %p152
      %p155 = scmp.ne.s32.totalorder %s140, %s154
      %p156 = scmp.eq.s32.totalorder %s32, 0
      %p157 = por %p155, %p156
      %s159 = sadd.s32 %s158, 1
      %p162 = scmp.eq.s32.totalorder %s26, 1
      %p163 = scmp.ne.s32.totalorder %s158, %s160
      %p164 = scmp.eq.s32.totalorder %s26, 0
      %p165 = por %p163, %p164
      %p166 = scmp.ne.s32.totalorder %s158, %s160
      %p167 = scmp.eq.s32.totalorder %s31, 1
      %p168 = por %p166, %p167
      %p169 = scmp.ne.s32.totalorder %s160, %s161
      %p170 = scmp.eq.s32.totalorder %s31, 0
      %p171 = por %p169, %p170
      %p172 = scmp.ne.s32.totalorder %s160, %s161
      %p173 = scmp.eq.s32.totalorder %s32, 1
      %p174 = por %p172, %p173
      %p176 = scmp.ne.s32.totalorder %s161, %s175
      %p177 = scmp.eq.s32.totalorder %s32, 0
      %p178 = por %p176, %p177
      %s179 = ssub.s32 %s33, %s45
      %s180 = ssub.s32 %s34, %s41
      %s181 = sor.u32 %s179, %s180
      %p182 = scmp.eq.s32.totalorder %s181, 0
      %s184 = sadd.s32 %s183, 1
      %s185 = scalar_select %p182, %s183, %s184
      %p188 = pneg %p182
      %p189 = scmp.eq.s32.totalorder %s26, 1
      %p190 = por %p188, %p189
      %p191 = scmp.ne.s32.totalorder %s183, %s186
      %p192 = scmp.eq.s32.totalorder %s26, 0
      %p193 = por %p191, %p192
      %p194 = scmp.ne.s32.totalorder %s183, %s186
      %p195 = scmp.eq.s32.totalorder %s31, 1
      %p196 = por %p194, %p195
      %p197 = scmp.ne.s32.totalorder %s186, %s187
      %p198 = scmp.eq.s32.totalorder %s31, 0
      %p199 = por %p197, %p198
      %p200 = scmp.ne.s32.totalorder %s186, %s187
      %p201 = scmp.eq.s32.totalorder %s32, 1
      %p202 = por %p200, %p201
      %p204 = scmp.ne.s32.totalorder %s187, %s203
      %p205 = scmp.eq.s32.totalorder %s32, 0
      %p206 = por %p204, %p205
      %s207 = ssub.s32 %s33, %s45
      %s208 = ssub.s32 %s34, %s41
      %s209 = sor.u32 %s207, %s208
      %p210 = scmp.eq.s32.totalorder %s209, 0
      %s212 = sadd.s32 %s211, 1
      %s213 = scalar_select %p210, %s211, %s212
      %p216 = pneg %p210
      %p217 = scmp.eq.s32.totalorder %s26, 1
      %p218 = por %p216, %p217
      %p219 = scmp.ne.s32.totalorder %s211, %s214
      %p220 = scmp.eq.s32.totalorder %s26, 0
      %p221 = por %p219, %p220
      %p222 = scmp.ne.s32.totalorder %s211, %s214
      %p223 = scmp.eq.s32.totalorder %s31, 1
      %p224 = por %p222, %p223
      %p225 = scmp.ne.s32.totalorder %s214, %s215
      %p226 = scmp.eq.s32.totalorder %s31, 0
      %p227 = por %p225, %p226
      %p228 = scmp.ne.s32.totalorder %s214, %s215
      %p229 = scmp.eq.s32.totalorder %s32, 1
      %p230 = por %p228, %p229
      %p232 = scmp.ne.s32.totalorder %s215, %s231
      %p233 = scmp.eq.s32.totalorder %s32, 0
      %p234 = por %p232, %p233
      %s235 = ssub.s32 %s33, %s45
      %s236 = ssub.s32 %s34, %s41
      %s237 = sor.u32 %s235, %s236
      %p238 = scmp.eq.s32.totalorder %s237, 0
      %s240 = sadd.s32 %s239, 1
      %s241 = scalar_select %p238, %s239, %s240
      %p244 = pneg %p238
      %p245 = scmp.eq.s32.totalorder %s26, 1
      %p246 = por %p244, %p245
      %p247 = scmp.ne.s32.totalorder %s239, %s242
      %p248 = scmp.eq.s32.totalorder %s26, 0
      %p249 = por %p247, %p248
      %p250 = scmp.ne.s32.totalorder %s239, %s242
      %p251 = scmp.eq.s32.totalorder %s31, 1
      %p252 = por %p250, %p251
      %p253 = scmp.ne.s32.totalorder %s242, %s243
      %p254 = scmp.eq.s32.totalorder %s31, 0
      %p255 = por %p253, %p254
      %p256 = scmp.ne.s32.totalorder %s242, %s243
      %p257 = scmp.eq.s32.totalorder %s32, 1
      %p258 = por %p256, %p257
      %p260 = scmp.ne.s32.totalorder %s243, %s259
      %p261 = scmp.eq.s32.totalorder %s32, 0
      %p262 = por %p260, %p261
      %p263 = scmp.le.s32.totalorder 1, %s26
      %p264 = scmp.lt.s32.totalorder %s26, 3
      %p265 = pnand %p263, %p264
      %p266 = pneg %p265
      // Predicated region
      $region9: #{tpu_custom_call.1} parent=5 // pred_check
        _
      $region10: #{tpu_custom_call.1} parent=5 // pred_check_branch
        %268 = sbr.rel (%p265) target = $region12
      $region11: #{tpu_custom_call.1} parent=5 // pred_region
        %s269 = ssub.s32 %s26, 1
        // Predicated region
        $region13: #{tpu_custom_call.1} parent=11 // pred_check
          %p270 = pneg %p87
        $region14: #{tpu_custom_call.1} parent=11 // pred_check_branch
          %272 = sbr.rel (%p270) target = $region16
        $region15: #{tpu_custom_call.1} parent=11 // pred_region
          _
        $region16: #{tpu_custom_call.1} parent=11 // pred_fallthru
          _
        // Predicated region
        $region17: #{tpu_custom_call.1} parent=11 // pred_check
          %p273 = pneg %p108
        $region18: #{tpu_custom_call.1} parent=11 // pred_check_branch
          %275 = sbr.rel (%p273) target = $region20
        $region19: #{tpu_custom_call.1} parent=11 // pred_region
          _
        $region20: #{tpu_custom_call.1} parent=11 // pred_fallthru
          _
        // Predicated region
        $region21: #{tpu_custom_call.1} parent=11 // pred_check
          %p276 = pneg %p129
        $region22: #{tpu_custom_call.1} parent=11 // pred_check_branch
          %278 = sbr.rel (%p276) target = $region24
        $region23: #{tpu_custom_call.1} parent=11 // pred_region
          %s280 = ssub.s32 512, 512
          %281 = vsyncadd [#allocation6], %s280
          %s282 = sshll.u32 [#allocation5], 4
          %s283 = int_to_ptr.vmem [resolvable:$true] %s282
          %288 = dma.hbm_to_vmem [thread:$0]  %s3, 512, %s283, [#allocation6], 64, 64, 4
        $region24: #{tpu_custom_call.1} parent=11 // pred_fallthru
          _
        // Predicated region
        $region25: #{tpu_custom_call.1} parent=11 // pred_check
          %p289 = pneg %p150
        $region26: #{tpu_custom_call.1} parent=11 // pred_check_branch
          %291 = sbr.rel (%p289) target = $region28
        $region27: #{tpu_custom_call.1} parent=11 // pred_region
          %s293 = ssub.s32 512, 512
          %294 = vsyncadd [#allocation6], %s293
          %s295 = sshll.u32 [#allocation7], 4
          %s296 = int_to_ptr.vmem [resolvable:$true] %s295
          %301 = dma.hbm_to_vmem [thread:$0]  %s4, 512, %s296, [#allocation6], 64, 64, 4
        $region28: #{tpu_custom_call.1} parent=11 // pred_fallthru
          _
        // Predicated region
        $region29: #{tpu_custom_call.1} parent=11 // pred_check
          %p302 = pneg %p171
        $region30: #{tpu_custom_call.1} parent=11 // pred_check_branch
          %304 = sbr.rel (%p302) target = $region32
        $region31: #{tpu_custom_call.1} parent=11 // pred_region
          %s306 = ssub.s32 512, 512
          %307 = vsyncadd [#allocation9], %s306
          %s308 = sshll.u32 [#allocation8], 4
          %s309 = int_to_ptr.vmem [resolvable:$true] %s308
          %314 = dma.hbm_to_vmem [thread:$0]  %s5, 512, %s309, [#allocation9], 64, 64, 4
        $region32: #{tpu_custom_call.1} parent=11 // pred_fallthru
          _
      $region12: #{tpu_custom_call.1} parent=5 // pred_fallthru
        _
      %p315 = scmp.lt.s32.totalorder %s26, 2
      // Predicated region
      $region33: #{tpu_custom_call.1} parent=5 // pred_check
        %p316 = pneg %p315
      $region34: #{tpu_custom_call.1} parent=5 // pred_check_branch
        %318 = sbr.rel (%p316) target = $region36
      $region35: #{tpu_custom_call.1} parent=5 // pred_region
        // Predicated region
        $region37: #{tpu_custom_call.1} parent=35 // pred_check
          %p319 = pneg %p60
        $region38: #{tpu_custom_call.1} parent=35 // pred_check_branch
          %321 = sbr.rel (%p319) target = $region40
        $region39: #{tpu_custom_call.1} parent=35 // pred_region
          %s322 = sand.u32 %s50, 1
          %s323 = scalar_lea.sflag [#allocation3], %s322
          %s324 = sand.u32 %s50, 1
          %s325 = smul.addr %s324, 16
          %s326 = scalar_lea.vmem [#allocation2], %s325
          %s327 = smul.u32 2, %s34
          %s329 = ssub.s32 256, 256
          %330 = vsyncadd %s323, %s329
          %s331 = smul.addr %s33, 2
          %s332 = sadd.s32 %s327, %s331
          %s333 = smul.addr %s332, 128
          %s334 = scalar_lea.hbm %s0, %s333
          %s335 = sshll.u32 %s326, 4
          %s336 = int_to_ptr.vmem [resolvable:$true] %s335
          %341 = dma.hbm_to_vmem [thread:$0]  %s334, 256, %s336, %s323, 128, 128, 8
        $region40: #{tpu_custom_call.1} parent=35 // pred_fallthru
          _
      $region36: #{tpu_custom_call.1} parent=5 // pred_fallthru
        _
      %p342 = scmp.le.s32.totalorder 1, %s26
      %p343 = scmp.lt.s32.totalorder %s26, 3
      %p344 = pnand %p342, %p343
      %p345 = pneg %p344
      // Predicated region
      $region41: #{tpu_custom_call.1} parent=5 // pred_check
        _
      $region42: #{tpu_custom_call.1} parent=5 // pred_check_branch
        %347 = sbr.rel (%p344) target = $region44
      $region43: #{tpu_custom_call.1} parent=5 // pred_region
        %s348 = ssub.s32 %s26, 1
        %s349 = sand.u32 %s53, 1
        %s350 = scalar_lea.sflag [#allocation3], %s349
        %s351 = sand.u32 %s53, 1
        %s352 = smul.addr %s351, 16
        %s353 = scalar_lea.vmem [#allocation2], %s352
        // Predicated region
        $region45: #{tpu_custom_call.1} parent=43 // pred_check
          %p354 = pneg %p66
        $region46: #{tpu_custom_call.1} parent=43 // pred_check_branch
          %356 = sbr.rel (%p354) target = $region48
        $region47: #{tpu_custom_call.1} parent=43 // pred_region
          %357 = dma.done %s350, 256
        $region48: #{tpu_custom_call.1} parent=43 // pred_fallthru
          _
        // Predicated region
        $region49: #{tpu_custom_call.1} parent=43 // pred_check
          %p358 = pneg %p129
        $region50: #{tpu_custom_call.1} parent=43 // pred_check_branch
          %360 = sbr.rel (%p358) target = $region52
        $region51: #{tpu_custom_call.1} parent=43 // pred_region
          %361 = dma.done [#allocation6], 512
        $region52: #{tpu_custom_call.1} parent=43 // pred_fallthru
          _
        // Predicated region
        $region53: #{tpu_custom_call.1} parent=43 // pred_check
          %p362 = pneg %p150
        $region54: #{tpu_custom_call.1} parent=43 // pred_check_branch
          %364 = sbr.rel (%p362) target = $region56
        $region55: #{tpu_custom_call.1} parent=43 // pred_region
          %365 = dma.done [#allocation6], 512
        $region56: #{tpu_custom_call.1} parent=43 // pred_fallthru
          _
        // Predicated region
        $region57: #{tpu_custom_call.1} parent=43 // pred_check
          %p366 = pneg %p171
        $region58: #{tpu_custom_call.1} parent=43 // pred_check_branch
          %368 = sbr.rel (%p366) target = $region60
        $region59: #{tpu_custom_call.1} parent=43 // pred_region
          %369 = dma.done [#allocation9], 512
        $region60: #{tpu_custom_call.1} parent=43 // pred_fallthru
          _
        %s370 = sand.u32 %s53, 1
        %s371 = scalar_lea.sflag [#allocation3], %s370
        %s372 = sand.u32 %s53, 1
        %s373 = smul.addr %s372, 16
        %s374 = scalar_lea.vmem [#allocation2], %s373
        %p375 = pneg %p66
        %p376 = pneg %p63
        %p377 = pneg %p87
        %p378 = pneg %p84
        %p379 = pneg %p108
        %p380 = pneg %p105
        %p381 = pneg %p129
        %p382 = pneg %p126
        %p383 = pneg %p150
        %p384 = pneg %p147
        %p385 = pneg %p171
        %p386 = pneg %p168
        %p387 = pneg %p199
        %p388 = pneg %p196
        %s389 = sand.u32 %s186, 1
        %s390 = scalar_lea.sflag [#allocation4], %s389
        %s391 = sand.u32 %s186, 1
        %s392 = smul.addr %s391, 32
        %s393 = scalar_lea.vmem [#allocation10], %s392
        %p394 = pneg %p227
        %p395 = pneg %p224
        %s396 = sand.u32 %s31, 1
        %s397 = scalar_lea.sflag [#allocation12], %s396
        %s398 = sand.u32 %s214, 1
        %s399 = smul.addr %s398, 32
        %s400 = scalar_lea.vmem [#allocation11], %s399
        %p401 = pneg %p255
        %p402 = pneg %p252
        %s403 = sand.u32 %s31, 1
        %s404 = scalar_lea.sflag [#allocation12], %s403
        %s405 = sand.u32 %s242, 1
        %s406 = smul.addr %s405, 32
        %s407 = scalar_lea.vmem [#allocation13], %s406
        %s408 = smul.u32 2, %s36
        %s409 = smul.u32 2, %s36
        %s410 = smul.u32 2, %s36
        %s411 = smul.u32 2, %s36
        %v413 = vld [vmem:[%s353] sm:$0xff]
        %v414 = vld [vmem:[%s353 + $0x8] sm:$0xff]
        %vm415 = vcmask 523264
        %v416 = vsel %vm415, %v413, 0.0
        %417 = vadd.xlane.f32.xlu0 %v416
        %v418 = vpop.xlane.xlu0 %417
        %v419 = vsel %vm415, %v414, 0.0
        %420 = vadd.xlane.f32.xlu0 %v419
        %v421 = vpop.xlane.xlu0 %420
        %v422 = vrcp.pop 64.0
        %v423 = vmul.f32 %v418, %v422
        %v424 = vmul.f32 %v421, %v422
        %v425 = vsub.f32 %v413, %v423
        %v426 = vsub.f32 %v414, %v424
        %v427 = vmul.f32 %v425, %v425
        %v428 = vmul.f32 %v426, %v426
        %v429 = vsel %vm415, %v427, 0.0
        %430 = vadd.xlane.f32.xlu0 %v429
        %v431 = vpop.xlane.xlu0 %430
        %v432 = vsel %vm415, %v428, 0.0
        %433 = vadd.xlane.f32.xlu0 %v432
        %v434 = vpop.xlane.xlu0 %433
        %v435 = vmul.f32 %v431, %v422
        %v436 = vmul.f32 %v434, %v422
        %v437 = vadd.f32 %v435, 1e-06
        %v438 = vadd.f32 %v436, 1e-06
        %v439 = vrsqrt.pop %v437
        %v440 = vrsqrt.pop %v438
        %v441 = vmul.f32 %v425, %v439
        %v442 = vmul.f32 %v426, %v440
        %v443 = vld [vmem:[%s1] sm:$0x1]
        %v445 = vlaneseq
        %v446 = vshrl.u32 %v445, 7
        %v447 = vsub.s32 0, %v446
        %v448 = vrot.slane %v443, %v447
        %v450 = vmul.f32 %v441, %v448
        %v451 = vmul.f32 %v442, %v448
        %v452 = vld [vmem:[%s2] sm:$0x1]
        %v454 = vlaneseq
        %v455 = vshrl.u32 %v454, 7
        %v456 = vsub.s32 0, %v455
        %v457 = vrot.slane %v452, %v456
        %v459 = vadd.f32 %v450, %v457
        %v460 = vadd.f32 %v451, %v457
        %v461 = vpack.c.bf16 %v460, %v459
        %v462 = vld [vmem:[#allocation5] sm:$0xf]
        %v463 = vld [vmem:[#allocation5 + $0x4] sm:$0xf]
        %v464 = vld [vmem:[#allocation5 + $0x8] sm:$0xf]
        %v465 = vld [vmem:[#allocation5 + $0xc] sm:$0xf]
        %v466 = vld [vmem:[#allocation5 + $0x10] sm:$0xf]
        %v467 = vld [vmem:[#allocation5 + $0x14] sm:$0xf]
        %v468 = vld [vmem:[#allocation5 + $0x18] sm:$0xf]
        %v469 = vld [vmem:[#allocation5 + $0x1c] sm:$0xf]
        %v478 = vunpack.c.l.b16 %v462
        %v479 = vunpack.c.l.b16 %v463
        %v480 = vunpack.c.l.b16 %v464
        %v481 = vunpack.c.l.b16 %v465
        %v482 = vunpack.c.l.b16 %v466
        %v483 = vunpack.c.l.b16 %v467
        %v484 = vunpack.c.l.b16 %v468
        %v485 = vunpack.c.l.b16 %v469
        %v486 = vpack.c.b16 %v479, %v478
        %v487 = vpack.c.b16 %v481, %v480
        %v488 = vpack.c.b16 %v483, %v482
        %v489 = vpack.c.b16 %v485, %v484
        %v495 = vsel %vm415, %v461, 0
        %497 = vmatprep.subr.bf16.mxu0 0
        %498 = vmatpush1.bf16.msra.mxu0 %v486
        %499 = vmatprep.subr.bf16.mxu0 0
        %500 = vmatpush1.bf16.msra.mxu0 %v487
        %501 = vmatprep.subr.bf16.mxu0 0
        %502 = vmatpush1.bf16.msra.mxu0 %v488
        %503 = vmatprep.subr.bf16.mxu0 0
        %504 = vmatpush1.bf16.msra.mxu0 %v489
        %505 = vmatprep.subr.bf16.mxu0 0
        %506 = vmatpush1.bf16.msra.mxu0 0
        %507 = vmatprep.subr.bf16.mxu0 0
        %508 = vmatpush1.bf16.msra.mxu0 0
        %509 = vmatprep.subr.bf16.mxu0 0
        %510 = vmatpush1.bf16.msra.mxu0 0
        %511 = vmatprep.subr.bf16.mxu0 0
        %512 = vmatpush1.bf16.msra.mxu0 0
        %513 = vmatprep.subr.bf16.mxu0 0
        %514 = vmatpush1.bf16.msra.mxu0 0
        %515 = vmatprep.subr.bf16.mxu0 0
        %516 = vmatpush1.bf16.msra.mxu0 0
        %517 = vmatprep.subr.bf16.mxu0 0
        %518 = vmatpush1.bf16.msra.mxu0 0
        %519 = vmatprep.subr.bf16.mxu0 0
        %520 = vmatpush1.bf16.msra.mxu0 0
        %521 = vmatprep.subr.bf16.mxu0 0
        %522 = vmatpush1.bf16.msra.mxu0 0
        %523 = vmatprep.subr.bf16.mxu0 0
        %524 = vmatpush1.bf16.msra.mxu0 0
        %525 = vmatprep.subr.bf16.mxu0 0
        %526 = vmatpush1.bf16.msra.mxu0 0
        %527 = vmatprep.subr.bf16.mxu0 0
        %528 = vmatpush1.bf16.msra.mxu0 0
        %529 = vmatprep.mubr.bf16.mxu0 0
        %530 = vmatmul.mubr.bf16.gmra.mrb[0].mxu0 %v495
        %v531 = vpop.f32.mrb[0].mxu0
        %v532 = vadd.f32 0.0, %v531
        %v533 = vpop.f32.mrb[0].mxu0
        %v534 = vpop.f32.mrb[0].mxu0
        %v535 = vadd.f32 0.0, %v534
        %v536 = vpop.f32.mrb[0].mxu0
        %537 = vdwg.mxu0
        %v538 = vld [vmem:[#allocation7] sm:$0xf]
        %v539 = vld [vmem:[#allocation7 + $0x4] sm:$0xf]
        %v540 = vld [vmem:[#allocation7 + $0x8] sm:$0xf]
        %v541 = vld [vmem:[#allocation7 + $0xc] sm:$0xf]
        %v542 = vld [vmem:[#allocation7 + $0x10] sm:$0xf]
        %v543 = vld [vmem:[#allocation7 + $0x14] sm:$0xf]
        %v544 = vld [vmem:[#allocation7 + $0x18] sm:$0xf]
        %v545 = vld [vmem:[#allocation7 + $0x1c] sm:$0xf]
        %v554 = vunpack.c.l.b16 %v538
        %v555 = vunpack.c.l.b16 %v539
        %v556 = vunpack.c.l.b16 %v540
        %v557 = vunpack.c.l.b16 %v541
        %v558 = vunpack.c.l.b16 %v542
        %v559 = vunpack.c.l.b16 %v543
        %v560 = vunpack.c.l.b16 %v544
        %v561 = vunpack.c.l.b16 %v545
        %v562 = vpack.c.b16 %v555, %v554
        %v563 = vpack.c.b16 %v557, %v556
        %v564 = vpack.c.b16 %v559, %v558
        %v565 = vpack.c.b16 %v561, %v560
        %570 = vmatprep.subr.bf16.mxu0 0
        %571 = vmatpush1.bf16.msra.mxu0 %v562
        %572 = vmatprep.subr.bf16.mxu0 0
        %573 = vmatpush1.bf16.msra.mxu0 %v563
        %574 = vmatprep.subr.bf16.mxu0 0
        %575 = vmatpush1.bf16.msra.mxu0 %v564
        %576 = vmatprep.subr.bf16.mxu0 0
        %577 = vmatpush1.bf16.msra.mxu0 %v565
        %578 = vmatprep.subr.bf16.mxu0 0
        %579 = vmatpush1.bf16.msra.mxu0 0
        %580 = vmatprep.subr.bf16.mxu0 0
        %581 = vmatpush1.bf16.msra.mxu0 0
        %582 = vmatprep.subr.bf16.mxu0 0
        %583 = vmatpush1.bf16.msra.mxu0 0
        %584 = vmatprep.subr.bf16.mxu0 0
        %585 = vmatpush1.bf16.msra.mxu0 0
        %586 = vmatprep.subr.bf16.mxu0 0
        %587 = vmatpush1.bf16.msra.mxu0 0
        %588 = vmatprep.subr.bf16.mxu0 0
        %589 = vmatpush1.bf16.msra.mxu0 0
        %590 = vmatprep.subr.bf16.mxu0 0
        %591 = vmatpush1.bf16.msra.mxu0 0
        %592 = vmatprep.subr.bf16.mxu0 0
        %593 = vmatpush1.bf16.msra.mxu0 0
        %594 = vmatprep.subr.bf16.mxu0 0
        %595 = vmatpush1.bf16.msra.mxu0 0
        %596 = vmatprep.subr.bf16.mxu0 0
        %597 = vmatpush1.bf16.msra.mxu0 0
        %598 = vmatprep.subr.bf16.mxu0 0
        %599 = vmatpush1.bf16.msra.mxu0 0
        %600 = vmatprep.subr.bf16.mxu0 0
        %601 = vmatpush1.bf16.msra.mxu0 0
        %602 = vmatprep.mubr.bf16.mxu0 0
        %603 = vmatmul.mubr.bf16.gmra.mrb[0].mxu0 %v495
        %v604 = vpop.f32.mrb[0].mxu0
        %v605 = vadd.f32 0.0, %v604
        %v606 = vpop.f32.mrb[0].mxu0
        %v607 = vpop.f32.mrb[0].mxu0
        %v608 = vadd.f32 0.0, %v607
        %v609 = vpop.f32.mrb[0].mxu0
        %610 = vdwg.mxu0
        %v611 = vld [vmem:[#allocation8] sm:$0xf]
        %v612 = vld [vmem:[#allocation8 + $0x4] sm:$0xf]
        %v613 = vld [vmem:[#allocation8 + $0x8] sm:$0xf]
        %v614 = vld [vmem:[#allocation8 + $0xc] sm:$0xf]
        %v615 = vld [vmem:[#allocation8 + $0x10] sm:$0xf]
        %v616 = vld [vmem:[#allocation8 + $0x14] sm:$0xf]
        %v617 = vld [vmem:[#allocation8 + $0x18] sm:$0xf]
        %v618 = vld [vmem:[#allocation8 + $0x1c] sm:$0xf]
        %v627 = vunpack.c.l.b16 %v611
        %v628 = vunpack.c.l.b16 %v612
        %v629 = vunpack.c.l.b16 %v613
        %v630 = vunpack.c.l.b16 %v614
        %v631 = vunpack.c.l.b16 %v615
        %v632 = vunpack.c.l.b16 %v616
        %v633 = vunpack.c.l.b16 %v617
        %v634 = vunpack.c.l.b16 %v618
        %v635 = vpack.c.b16 %v628, %v627
        %v636 = vpack.c.b16 %v630, %v629
        %v637 = vpack.c.b16 %v632, %v631
        %v638 = vpack.c.b16 %v634, %v633
        %643 = vmatprep.subr.bf16.mxu0 0
        %644 = vmatpush1.bf16.msra.mxu0 %v635
        %645 = vmatprep.subr.bf16.mxu0 0
        %646 = vmatpush1.bf16.msra.mxu0 %v636
        %647 = vmatprep.subr.bf16.mxu0 0
        %648 = vmatpush1.bf16.msra.mxu0 %v637
        %649 = vmatprep.subr.bf16.mxu0 0
        %650 = vmatpush1.bf16.msra.mxu0 %v638
        %651 = vmatprep.subr.bf16.mxu0 0
        %652 = vmatpush1.bf16.msra.mxu0 0
        %653 = vmatprep.subr.bf16.mxu0 0
        %654 = vmatpush1.bf16.msra.mxu0 0
        %655 = vmatprep.subr.bf16.mxu0 0
        %656 = vmatpush1.bf16.msra.mxu0 0
        %657 = vmatprep.subr.bf16.mxu0 0
        %658 = vmatpush1.bf16.msra.mxu0 0
        %659 = vmatprep.subr.bf16.mxu0 0
        %660 = vmatpush1.bf16.msra.mxu0 0
        %661 = vmatprep.subr.bf16.mxu0 0
        %662 = vmatpush1.bf16.msra.mxu0 0
        %663 = vmatprep.subr.bf16.mxu0 0
        %664 = vmatpush1.bf16.msra.mxu0 0
        %665 = vmatprep.subr.bf16.mxu0 0
        %666 = vmatpush1.bf16.msra.mxu0 0
        %667 = vmatprep.subr.bf16.mxu0 0
        %668 = vmatpush1.bf16.msra.mxu0 0
        %669 = vmatprep.subr.bf16.mxu0 0
        %670 = vmatpush1.bf16.msra.mxu0 0
        %671 = vmatprep.subr.bf16.mxu0 0
        %672 = vmatpush1.bf16.msra.mxu0 0
        %673 = vmatprep.subr.bf16.mxu0 0
        %674 = vmatpush1.bf16.msra.mxu0 0
        %675 = vmatprep.mubr.bf16.mxu0 0
        %676 = vmatmul.mubr.bf16.gmra.mrb[0].mxu0 %v495
        %v677 = vpop.f32.mrb[0].mxu0
        %v678 = vadd.f32 0.0, %v677
        %v679 = vpop.f32.mrb[0].mxu0
        %v680 = vpop.f32.mrb[0].mxu0
        %v681 = vadd.f32 0.0, %v680
        %v682 = vpop.f32.mrb[0].mxu0
        %683 = vdwg.mxu0
        %v684 = vpack.c.bf16 %v535, %v532
        %v686 = vunpack.c.l.b16 %v684
        %v687 = vunpack.c.h.b16 %v684
        %v688 = vpack.c.b16 %v686, %v686
        %v689 = vpack.c.b16 %v687, %v687
        %vm692 = vcmask 125952
        %693 = vst.msk [vmem:[%s393] sm:$0xf] %vm692, %v688
        %694 = vst.msk [vmem:[%s393 + $0x4] sm:$0xf] %vm692, %v689
        %v695 = vpack.c.bf16 %v608, %v605
        %v697 = vunpack.c.l.b16 %v695
        %v698 = vunpack.c.h.b16 %v695
        %v699 = vpack.c.b16 %v697, %v697
        %v700 = vpack.c.b16 %v698, %v698
        %703 = vst.msk [vmem:[%s400] sm:$0xf] %vm692, %v699
        %704 = vst.msk [vmem:[%s400 + $0x4] sm:$0xf] %vm692, %v700
        %v705 = vpack.c.bf16 %v681, %v678
        %v707 = vunpack.c.l.b16 %v705
        %v708 = vunpack.c.h.b16 %v705
        %v709 = vpack.c.b16 %v707, %v707
        %v710 = vpack.c.b16 %v708, %v708
        %713 = vst.msk [vmem:[%s407] sm:$0xf] %vm692, %v709
        %714 = vst.msk [vmem:[%s407 + $0x4] sm:$0xf] %vm692, %v710
        %715 = vrot.lane.b32.xlu0 %v688, 112
        %v716 = vpop.permute.xlu0 %715
        %717 = vrot.lane.b32.xlu0 %v689, 112
        %v718 = vpop.permute.xlu0 %717
        %s721 = scalar_lea.vmem %s393, 8 [#allocation10]
        %722 = vst.msk [vmem:[%s721] sm:$0xf] %vm692, %v716
        %723 = vst.msk [vmem:[%s721 + $0x4] sm:$0xf] %vm692, %v718
        %724 = vrot.lane.b32.xlu0 %v699, 112
        %v725 = vpop.permute.xlu0 %724
        %726 = vrot.lane.b32.xlu0 %v700, 112
        %v727 = vpop.permute.xlu0 %726
        %s730 = scalar_lea.vmem %s400, 8 [#allocation11]
        %731 = vst.msk [vmem:[%s730] sm:$0xf] %vm692, %v725
        %732 = vst.msk [vmem:[%s730 + $0x4] sm:$0xf] %vm692, %v727
        %733 = vrot.lane.b32.xlu0 %v709, 112
        %v734 = vpop.permute.xlu0 %733
        %735 = vrot.lane.b32.xlu0 %v710, 112
        %v736 = vpop.permute.xlu0 %735
        %s739 = scalar_lea.vmem %s407, 8 [#allocation13]
        %740 = vst.msk [vmem:[%s739] sm:$0xf] %vm692, %v734
        %741 = vst.msk [vmem:[%s739 + $0x4] sm:$0xf] %vm692, %v736
        %742 = vrot.lane.b32.xlu0 %v688, 96
        %v743 = vpop.permute.xlu0 %742
        %744 = vrot.lane.b32.xlu0 %v689, 96
        %v745 = vpop.permute.xlu0 %744
        %s748 = scalar_lea.vmem %s393, 16 [#allocation10]
        %749 = vst.msk [vmem:[%s748] sm:$0xf] %vm692, %v743
        %750 = vst.msk [vmem:[%s748 + $0x4] sm:$0xf] %vm692, %v745
        %751 = vrot.lane.b32.xlu0 %v699, 96
        %v752 = vpop.permute.xlu0 %751
        %753 = vrot.lane.b32.xlu0 %v700, 96
        %v754 = vpop.permute.xlu0 %753
        %s757 = scalar_lea.vmem %s400, 16 [#allocation11]
        %758 = vst.msk [vmem:[%s757] sm:$0xf] %vm692, %v752
        %759 = vst.msk [vmem:[%s757 + $0x4] sm:$0xf] %vm692, %v754
        %760 = vrot.lane.b32.xlu0 %v709, 96
        %v761 = vpop.permute.xlu0 %760
        %762 = vrot.lane.b32.xlu0 %v710, 96
        %v763 = vpop.permute.xlu0 %762
        %s766 = scalar_lea.vmem %s407, 16 [#allocation13]
        %767 = vst.msk [vmem:[%s766] sm:$0xf] %vm692, %v761
        %768 = vst.msk [vmem:[%s766 + $0x4] sm:$0xf] %vm692, %v763
        %769 = vrot.lane.b32.xlu0 %v688, 80
        %v770 = vpop.permute.xlu0 %769
        %771 = vrot.lane.b32.xlu0 %v689, 80
        %v772 = vpop.permute.xlu0 %771
        %s775 = scalar_lea.vmem %s393, 24 [#allocation10]
        %776 = vst.msk [vmem:[%s775] sm:$0xf] %vm692, %v770
        %777 = vst.msk [vmem:[%s775 + $0x4] sm:$0xf] %vm692, %v772
        %778 = vrot.lane.b32.xlu0 %v699, 80
        %v779 = vpop.permute.xlu0 %778
        %780 = vrot.lane.b32.xlu0 %v700, 80
        %v781 = vpop.permute.xlu0 %780
        %s784 = scalar_lea.vmem %s400, 24 [#allocation11]
        %785 = vst.msk [vmem:[%s784] sm:$0xf] %vm692, %v779
        %786 = vst.msk [vmem:[%s784 + $0x4] sm:$0xf] %vm692, %v781
        %787 = vrot.lane.b32.xlu0 %v709, 80
        %v788 = vpop.permute.xlu0 %787
        %789 = vrot.lane.b32.xlu0 %v710, 80
        %v790 = vpop.permute.xlu0 %789
        %s793 = scalar_lea.vmem %s407, 24 [#allocation13]
        %794 = vst.msk [vmem:[%s793] sm:$0xf] %vm692, %v788
        %795 = vst.msk [vmem:[%s793 + $0x4] sm:$0xf] %vm692, %v790
        %s796 = sand.u32 %s186, 1
        %s797 = scalar_lea.sflag [#allocation4], %s796
        %s798 = sand.u32 %s186, 1
        %s799 = smul.addr %s798, 32
        %s800 = scalar_lea.vmem [#allocation10], %s799
        %s801 = sand.u32 %s31, 1
        %s802 = scalar_lea.sflag [#allocation12], %s801
        %s803 = sand.u32 %s214, 1
        %s804 = smul.addr %s803, 32
        %s805 = scalar_lea.vmem [#allocation11], %s804
        %s806 = sand.u32 %s31, 1
        %s807 = scalar_lea.sflag [#allocation12], %s806
        %s808 = sand.u32 %s242, 1
        %s809 = smul.addr %s808, 32
        %s810 = scalar_lea.vmem [#allocation13], %s809
        // Predicated region
        $region61: #{tpu_custom_call.1} parent=43 // pred_check
          %p811 = pneg %p196
        $region62: #{tpu_custom_call.1} parent=43 // pred_check_branch
          %813 = sbr.rel (%p811) target = $region64
        $region63: #{tpu_custom_call.1} parent=43 // pred_region
          %s814 = smul.u32 2, %s36
          %s816 = ssub.s32 512, 512
          %817 = vsyncadd %s797, %s816
          %s818 = smul.addr %s35, 8
          %s819 = sadd.s32 %s814, %s818
          %s820 = smul.addr %s819, 64
          %s821 = scalar_lea.hbm %s6, %s820
          %s822 = sshll.u32 %s800, 4
          %s823 = int_to_ptr.vmem [resolvable:$true] %s822
          %828 = dma.vmem_to_hbm [thread:$0]  %s823, 512, %s821, %s797, 64, 64, 4
        $region64: #{tpu_custom_call.1} parent=43 // pred_fallthru
          _
        // Predicated region
        $region65: #{tpu_custom_call.1} parent=43 // pred_check
          %p829 = pneg %p224
        $region66: #{tpu_custom_call.1} parent=43 // pred_check_branch
          %831 = sbr.rel (%p829) target = $region68
        $region67: #{tpu_custom_call.1} parent=43 // pred_region
          %s832 = smul.u32 2, %s36
          %s834 = ssub.s32 512, 512
          %835 = vsyncadd %s802, %s834
          %s836 = smul.addr %s35, 8
          %s837 = sadd.s32 %s832, %s836
          %s838 = smul.addr %s837, 64
          %s839 = scalar_lea.hbm %s7, %s838
          %s840 = sshll.u32 %s805, 4
          %s841 = int_to_ptr.vmem [resolvable:$true] %s840
          %846 = dma.vmem_to_hbm [thread:$0]  %s841, 512, %s839, %s802, 64, 64, 4
        $region68: #{tpu_custom_call.1} parent=43 // pred_fallthru
          _
        // Predicated region
        $region69: #{tpu_custom_call.1} parent=43 // pred_check
          %p847 = pneg %p252
        $region70: #{tpu_custom_call.1} parent=43 // pred_check_branch
          %849 = sbr.rel (%p847) target = $region72
        $region71: #{tpu_custom_call.1} parent=43 // pred_region
          %s850 = smul.u32 2, %s36
          %s852 = ssub.s32 512, 512
          %853 = vsyncadd %s807, %s852
          %s854 = smul.addr %s35, 8
          %s855 = sadd.s32 %s850, %s854
          %s856 = smul.addr %s855, 64
          %s857 = scalar_lea.hbm %s8, %s856
          %s858 = sshll.u32 %s810, 4
          %s859 = int_to_ptr.vmem [resolvable:$true] %s858
          %864 = dma.vmem_to_hbm [thread:$0]  %s859, 512, %s857, %s807, 64, 64, 4
        $region72: #{tpu_custom_call.1} parent=43 // pred_fallthru
          _
      $region44: #{tpu_custom_call.1} parent=5 // pred_fallthru
        _
      %p865 = scmp.le.s32.totalorder 2, %s26
      // Predicated region
      $region73: #{tpu_custom_call.1} parent=5 // pred_check
        %p866 = pneg %p865
      $region74: #{tpu_custom_call.1} parent=5 // pred_check_branch
        %868 = sbr.rel (%p866) target = $region76
      $region75: #{tpu_custom_call.1} parent=5 // pred_region
        %s869 = ssub.s32 %s26, 2
        // Predicated region
        $region77: #{tpu_custom_call.1} parent=75 // pred_check
          %p870 = pneg %p202
        $region78: #{tpu_custom_call.1} parent=75 // pred_check_branch
          %872 = sbr.rel (%p870) target = $region80
        $region79: #{tpu_custom_call.1} parent=75 // pred_region
          %s873 = sand.u32 %s187, 1
          %s874 = scalar_lea.sflag [#allocation4], %s873
          %s875 = sand.u32 %s187, 1
          %s876 = smul.addr %s875, 32
          %s877 = scalar_lea.vmem [#allocation10], %s876
          %878 = dma.done %s874, 512
        $region80: #{tpu_custom_call.1} parent=75 // pred_fallthru
          _
        // Predicated region
        $region81: #{tpu_custom_call.1} parent=75 // pred_check
          %p879 = pneg %p230
        $region82: #{tpu_custom_call.1} parent=75 // pred_check_branch
          %881 = sbr.rel (%p879) target = $region84
        $region83: #{tpu_custom_call.1} parent=75 // pred_region
          %s882 = sand.u32 %s32, 1
          %s883 = scalar_lea.sflag [#allocation12], %s882
          %s884 = sand.u32 %s215, 1
          %s885 = smul.addr %s884, 32
          %s886 = scalar_lea.vmem [#allocation11], %s885
          %887 = dma.done %s883, 512
        $region84: #{tpu_custom_call.1} parent=75 // pred_fallthru
          _
        // Predicated region
        $region85: #{tpu_custom_call.1} parent=75 // pred_check
          %p888 = pneg %p258
        $region86: #{tpu_custom_call.1} parent=75 // pred_check_branch
          %890 = sbr.rel (%p888) target = $region88
        $region87: #{tpu_custom_call.1} parent=75 // pred_region
          %s891 = sand.u32 %s32, 1
          %s892 = scalar_lea.sflag [#allocation12], %s891
          %s893 = sand.u32 %s243, 1
          %s894 = smul.addr %s893, 32
          %s895 = scalar_lea.vmem [#allocation13], %s894
          %896 = dma.done %s892, 512
        $region88: #{tpu_custom_call.1} parent=75 // pred_fallthru
          _
      $region76: #{tpu_custom_call.1} parent=5 // pred_fallthru
        _
    $region6: #{tpu_custom_call.1} parent=1 // loop_footer
      %s30 = sadd.s32 1, %s26
    $region7: #{tpu_custom_call.1} parent=1 // loop_footer_branch
      %25 = sbr.rel target = $region3
    $region8: #{tpu_custom_call.1} parent=1 // loop_exit
      _
    %897 = vsyncpa [#allocation3], 1
    %s898 = scalar_lea.sflag [#allocation3], 1
    %899 = vsyncpa %s898, 1
    %900 = vsyncpa [#allocation6], 1
    %901 = vsyncpa [#allocation9], 1
    %902 = vsyncpa [#allocation4], 1
    %s903 = scalar_lea.sflag [#allocation4], 1
    %904 = vsyncpa %s903, 1
    %905 = vsyncpa [#allocation12], 1
    %s906 = scalar_lea.sflag [#allocation12], 1
    %907 = vsyncpa %s906, 1

</llo_original>
